<compile_context>
chip_gen: v5e
topology: v5e:2x2
jax: 0.10.0
libtpu: 0.0.40
codegen_flags: <defaults>
</compile_context>

<pallas_src>
import functools

import numpy as np
import jax
import jax.numpy as jnp
from jax import lax
from jax.experimental import pallas as pl
from jax.experimental.pallas import tpu as pltpu


_VMEM_LIMIT_BYTES = 32 * 1024 * 1024      # safe on v5e/v6e (128 MiB) and v7x (64 MiB)
_VMEM_TILE_BUDGET = 20 * 1024 * 1024      # target per-step working set (headroom left)


# --------------------------------- kernel -----------------------------------

def _fused_head_kernel(xcol_ref, w1_ref, shift_ref, w2_ref, b2_ref, out_ref,
                       *, num_classes):
    """One (batch, dhw-tile) grid point of the fused 3-branch head.

    xcol_ref : (1, 27*C_in, T)        im2col'd input slab, spatial on lanes
    w1_ref   : (3*C_mid, 27*C_in)     BN-scale-folded 3x3x3 conv weights
    shift_ref: (3*C_mid, 1)           folded BN shift (+ conv1 bias)
    w2_ref   : (C_out_all, 3*C_mid)   block-diagonal 1x1x1 conv weights
    b2_ref   : (C_out_all, 1)         1x1x1 conv biases
    out_ref  : (1, C_out_all, T)      [hm | wh | offset] rows, NC(DHW) layout
    """
    xcol = xcol_ref[0]                                           # (K, T)
    # conv1 (+ folded BN scale) as one MXU matmul, spatial on the lane axis
    h = jnp.dot(w1_ref[...], xcol, preferred_element_type=jnp.float32)
    h = jnp.maximum(h + shift_ref[...], 0.0)                     # BN shift + ReLU
    # three 1x1x1 convs fused into one block-diagonal matmul
    y = jnp.dot(w2_ref[...], h, preferred_element_type=jnp.float32) + b2_ref[...]
    # sigmoid only on the first `num_classes` (cls) rows, via a row mask
    # (EUP sigmoid + VPU select; both off the MXU critical path)
    row = lax.broadcasted_iota(jnp.int32, y.shape, 0)
    y = jnp.where(row < num_classes, jax.nn.sigmoid(y), y)
    out_ref[0] = y.astype(out_ref.dtype)


# --------------------------------- wrapper -----------------------------------

def _pick_dhw_tile(dhw, k_rows, c_mid_all, c_out_all):
    """Pick the lane tile T (multiple of 128) and the padded DHW extent.

    T is the largest multiple of 128 that (a) divides the 128-padded DHW and
    (b) keeps the per-step VMEM working set (double-buffered xcol + output
    blocks, f32 intermediates, resident weights) under _VMEM_TILE_BUDGET.
    """
    dhw_pad = -(-dhw // 128) * 128
    per_col = 4 * (2 * k_rows            # im2col block, double-buffered
                   + 2 * c_out_all       # output block, double-buffered
                   + c_mid_all           # hidden activation h
                   + c_out_all)          # y before store
    weights = 4 * (c_mid_all * k_rows + c_mid_all
                   + c_out_all * c_mid_all + c_out_all)
    t_max = max(128, ((_VMEM_TILE_BUDGET - weights) // per_col) // 128 * 128)
    t = min(t_max, dhw_pad)
    while t > 128 and dhw_pad % t != 0:
        t -= 128
    return t, dhw_pad


def _im2col_3x3x3(x_ncdhw):
    """(N, C, D, H, W) -> (N, 27*C, D*H*W), rows ordered tap-major (kd,kh,kw,c)."""
    N, C, D, H, W = x_ncdhw.shape
    xpad = jnp.pad(x_ncdhw, ((0, 0), (0, 0), (1, 1), (1, 1), (1, 1)))
    taps = []
    for kd in range(3):
        for kh in range(3):
            for kw in range(3):
                taps.append(xpad[:, :, kd:kd + D, kh:kh + H, kw:kw + W])
    xcol = jnp.stack(taps, axis=1)                 # (N, 27, C, D, H, W)
    return xcol.reshape(N, 27 * C, D * H * W)


def _fold_branch(p, eps=1e-5):
    """Fold eval-mode BN (+ conv1 bias) into conv1 weights / additive shift."""
    scale = p["gamma"] / jnp.sqrt(p["var"] + eps)          # (C_mid,)
    shift = p["beta"] + (p["b1"] - p["mean"]) * scale      # (C_mid,)
    w1s = p["w1"] * scale[:, None, None, None, None]       # scale folded into w1
    c_mid, c_in = w1s.shape[0], w1s.shape[1]
    # column order (kd, kh, kw, c) matches _im2col_3x3x3 row order
    w1_mat = jnp.transpose(w1s, (0, 2, 3, 4, 1)).reshape(c_mid, 27 * c_in)
    w2_mat = p["w2"][:, :, 0, 0, 0]                        # (C_out, C_mid)
    return w1_mat, shift, w2_mat, p["b2"]


def _fuse_heads(p_cls, p_wh, p_reg, eps=1e-5):
    folded = [_fold_branch(p, eps) for p in (p_cls, p_wh, p_reg)]
    w1_all = jnp.concatenate([f[0] for f in folded], axis=0)          # (3*C_mid, 27*C_in)
    shift_all = jnp.concatenate([f[1] for f in folded], axis=0)[:, None]
    c_mid = folded[0][0].shape[0]
    outs = [f[2].shape[0] for f in folded]
    w2_all = jnp.zeros((sum(outs), 3 * c_mid), jnp.float32)
    r = 0
    for i, f in enumerate(folded):
        w2b = f[2]
        w2_all = w2_all.at[r:r + w2b.shape[0], i * c_mid:(i + 1) * c_mid].set(w2b)
        r += w2b.shape[0]
    b2_all = jnp.concatenate([f[3] for f in folded], axis=0)[:, None]
    return w1_all, shift_all, w2_all, b2_all, outs


def _fused_head_call(xcol, w1, shift, w2, b2, num_classes):
    N, K, DHW = xcol.shape
    C_mid_all = w1.shape[0]
    C_out_all = w2.shape[0]
    T, DHW_pad = _pick_dhw_tile(DHW, K, C_mid_all, C_out_all)
    if DHW_pad != DHW:
        xcol = jnp.pad(xcol, ((0, 0), (0, 0), (0, DHW_pad - DHW)))
    grid = (N, DHW_pad // T)
    kernel = functools.partial(_fused_head_kernel, num_classes=num_classes)
    y = pl.pallas_call(
        kernel,
        out_shape=jax.ShapeDtypeStruct((N, C_out_all, DHW_pad), jnp.float32),
        grid_spec=pltpu.PrefetchScalarGridSpec(
            num_scalar_prefetch=0,
            grid=grid,
            in_specs=[
                pl.BlockSpec((1, K, T), lambda n, t: (n, 0, t)),
                # weight / bias blocks: constant block index -> DMA'd once,
                # stay resident in VMEM across the whole grid
                pl.BlockSpec((C_mid_all, K), lambda n, t: (0, 0)),
                pl.BlockSpec((C_mid_all, 1), lambda n, t: (0, 0)),
                pl.BlockSpec((C_out_all, C_mid_all), lambda n, t: (0, 0)),
                pl.BlockSpec((C_out_all, 1), lambda n, t: (0, 0)),
            ],
            out_specs=pl.BlockSpec((1, C_out_all, T), lambda n, t: (n, 0, t)),
        ),
        compiler_params=pltpu.CompilerParams(
            dimension_semantics=("parallel", "parallel"),
            vmem_limit_bytes=_VMEM_LIMIT_BYTES),
    )(xcol, w1, shift, w2, b2)
    return y[:, :, :DHW] if DHW_pad != DHW else y


def head_forward(x_ncdhw, p_cls, p_wh, p_reg, *, num_classes, eps=1e-5):
    """Full Head.forward: returns (hm, wh, offset) in NCDHW like PyTorch."""
    N, C_in, D, H, W = x_ncdhw.shape
    w1, shift, w2, b2, outs = _fuse_heads(p_cls, p_wh, p_reg, eps)
    xcol = _im2col_3x3x3(x_ncdhw)
    y = _fused_head_call(xcol, w1, shift, w2, b2, num_classes)
    y = y.reshape(N, sum(outs), D, H, W)                  # already NCDHW
    nc, nw = outs[0], outs[1]
    return y[:, :nc], y[:, nc:nc + nw], y[:, nc + nw:]


# ----------------------- parameter setup (deterministic) --------------------

def make_branch_params(key, in_channels, inter_channels, out_channels,
                       conv1_bias):
    ks = jax.random.split(key, 8)
    w1 = 0.1 * jax.random.normal(
        ks[0], (inter_channels, in_channels, 3, 3, 3), jnp.float32)
    if conv1_bias:
        b1 = 0.1 * jax.random.normal(ks[1], (inter_channels,), jnp.float32)
    else:
        b1 = jnp.zeros((inter_channels,), jnp.float32)
    gamma = 1.0 + 0.1 * jax.random.normal(ks[2], (inter_channels,), jnp.float32)
    beta = 0.1 * jax.random.normal(ks[3], (inter_channels,), jnp.float32)
    mean = 0.1 * jax.random.normal(ks[4], (inter_channels,), jnp.float32)
    var = 0.5 + jax.random.uniform(ks[5], (inter_channels,), jnp.float32)
    w2 = 0.1 * jax.random.normal(
        ks[6], (out_channels, inter_channels, 1, 1, 1), jnp.float32)
    b2 = 0.1 * jax.random.normal(ks[7], (out_channels,), jnp.float32)
    return dict(w1=w1, b1=b1, gamma=gamma, beta=beta, mean=mean, var=var,
                w2=w2, b2=b2)


# ------------------------------ reference (plain JAX) ------------------------

def ref_branch(x, p, *, sigmoid, eps=1e-5):
    dn = ('NCDHW', 'OIDHW', 'NCDHW')
    hi = lax.Precision.HIGHEST
    y = lax.conv_general_dilated(x, p["w1"], (1, 1, 1), [(1, 1)] * 3,
                                 dimension_numbers=dn, precision=hi)
    y = y + p["b1"][None, :, None, None, None]
    bshape = (1, -1, 1, 1, 1)
    y = ((y - p["mean"].reshape(bshape)) /
         jnp.sqrt(p["var"].reshape(bshape) + eps) *
         p["gamma"].reshape(bshape) + p["beta"].reshape(bshape))
    y = jnp.maximum(y, 0.0)
    y = lax.conv_general_dilated(y, p["w2"], (1, 1, 1), [(0, 0)] * 3,
                                 dimension_numbers=dn, precision=hi)
    y = y + p["b2"][None, :, None, None, None]
    if sigmoid:
        y = jax.nn.sigmoid(y)
    return y


if __name__ == "__main__":
    # NOTE: BatchNorm3d is implemented with eval/inference semantics
    # (running stats folded into the conv weights), matching model deployment.
    key = jax.random.PRNGKey(0)
    N, C_in, C_mid, num_classes = 2, 16, 16, 4
    D = H = W = 8
    kx, kc, kw_, kr = jax.random.split(key, 4)
    x = jax.random.normal(kx, (N, C_in, D, H, W), jnp.float32)

    p_cls = make_branch_params(kc, C_in, C_mid, num_classes, conv1_bias=True)
    p_wh = make_branch_params(kw_, C_in, C_mid, 3, conv1_bias=False)
    p_reg = make_branch_params(kr, C_in, C_mid, 3, conv1_bias=False)

    fwd = jax.jit(functools.partial(head_forward, num_classes=num_classes))
    hm, wh, offset = fwd(x, p_cls, p_wh, p_reg)
    jax.block_until_ready((hm, wh, offset))

    # correctness check against plain-JAX reference (eval-mode BatchNorm)
    hm_ref = ref_branch(x, p_cls, sigmoid=True)
    wh_ref = ref_branch(x, p_wh, sigmoid=False)
    off_ref = ref_branch(x, p_reg, sigmoid=False)
    np.testing.assert_allclose(np.asarray(hm), np.asarray(hm_ref),
                               rtol=5e-3, atol=5e-3)
    np.testing.assert_allclose(np.asarray(wh), np.asarray(wh_ref),
                               rtol=5e-3, atol=5e-3)
    np.testing.assert_allclose(np.asarray(offset), np.asarray(off_ref),
                               rtol=5e-3, atol=5e-3)

    print("KERNEL_OK")
</pallas_src>

<mosaic_0001>
module attributes {stable_mosaic.version = 11 : i64} {
  func.func @_fused_head_kernel(%arg0: i32, %arg1: i32, %arg2: memref<1x432x512xf32, #tpu.memory_space<vmem>>, %arg3: memref<48x432xf32, #tpu.memory_space<vmem>>, %arg4: memref<48x1xf32, #tpu.memory_space<vmem>>, %arg5: memref<10x48xf32, #tpu.memory_space<vmem>>, %arg6: memref<10x1xf32, #tpu.memory_space<vmem>>, %arg7: memref<1x10x512xf32, #tpu.memory_space<vmem>>) attributes {dimension_semantics = [#tpu.dimension_semantics<parallel>, #tpu.dimension_semantics<parallel>], iteration_bounds = array<i64: 2, 1>, scalar_prefetch = 0 : i64, scratch_operands = 0 : i64, tpu.core_type = #tpu.core_type<tc>, window_params = [{transform_indices = @transform_0, window_bounds = array<i64: 1, 432, 512>}, {pipeline_mode = #tpu.pipeline_mode<synchronous>, transform_indices = @transform_1, window_bounds = array<i64: 48, 432>}, {pipeline_mode = #tpu.pipeline_mode<synchronous>, transform_indices = @transform_2, window_bounds = array<i64: 48, 1>}, {pipeline_mode = #tpu.pipeline_mode<synchronous>, transform_indices = @transform_3, window_bounds = array<i64: 10, 48>}, {pipeline_mode = #tpu.pipeline_mode<synchronous>, transform_indices = @transform_4, window_bounds = array<i64: 10, 1>}, {transform_indices = @transform_5, window_bounds = array<i64: 1, 10, 512>}]} {
    %c0 = arith.constant 0 : index
    %c0_0 = arith.constant 0 : index
    %c0_1 = arith.constant 0 : index
    %0 = vector.load %arg2[%c0, %c0_0, %c0_1] : memref<1x432x512xf32, #tpu.memory_space<vmem>>, vector<1x432x512xf32>
    %1 = vector.shape_cast %0 : vector<1x432x512xf32> to vector<432x512xf32>
    %c0_2 = arith.constant 0 : index
    %c0_3 = arith.constant 0 : index
    %2 = vector.load %arg3[%c0_2, %c0_3] : memref<48x432xf32, #tpu.memory_space<vmem>>, vector<48x432xf32>
    %cst = arith.constant dense<0.000000e+00> : vector<48x512xf32>
    %3 = tpu.matmul %2, %1, %cst {dimension_numbers = #tpu.dot_dimension_numbers<[1], [0], [0], [1], [0, 0, 1, 1], [], []>} : vector<48x432xf32>, vector<432x512xf32>, vector<48x512xf32> -> vector<48x512xf32>
    %c0_4 = arith.constant 0 : index
    %c0_5 = arith.constant 0 : index
    %4 = vector.load %arg4[%c0_4, %c0_5] : memref<48x1xf32, #tpu.memory_space<vmem>>, vector<48x1xf32>
    %5 = vector.broadcast %4 : vector<48x1xf32> to vector<48x512xf32>
    %6 = arith.addf %3, %5 : vector<48x512xf32>
    %cst_6 = arith.constant 0.000000e+00 : f32
    %7 = vector.broadcast %cst_6 : f32 to vector<48x512xf32>
    %8 = arith.maximumf %6, %7 : vector<48x512xf32>
    %c0_7 = arith.constant 0 : index
    %c0_8 = arith.constant 0 : index
    %9 = vector.load %arg5[%c0_7, %c0_8] : memref<10x48xf32, #tpu.memory_space<vmem>>, vector<10x48xf32>
    %cst_9 = arith.constant dense<0.000000e+00> : vector<10x512xf32>
    %10 = tpu.matmul %9, %8, %cst_9 {dimension_numbers = #tpu.dot_dimension_numbers<[1], [0], [0], [1], [0, 0, 1, 1], [], []>} : vector<10x48xf32>, vector<48x512xf32>, vector<10x512xf32> -> vector<10x512xf32>
    %c0_10 = arith.constant 0 : index
    %c0_11 = arith.constant 0 : index
    %11 = vector.load %arg6[%c0_10, %c0_11] : memref<10x1xf32, #tpu.memory_space<vmem>>, vector<10x1xf32>
    %12 = vector.broadcast %11 : vector<10x1xf32> to vector<10x512xf32>
    %13 = arith.addf %10, %12 : vector<10x512xf32>
    %14 = tpu.iota {dimensions = array<i32: 0>} : vector<10x512xi32>
    %c4_i32 = arith.constant 4 : i32
    %15 = vector.broadcast %c4_i32 : i32 to vector<10x512xi32>
    %16 = arith.cmpi slt, %14, %15 : vector<10x512xi32>
    %17 = arith.negf %13 : vector<10x512xf32>
    %18 = math.exp %17 : vector<10x512xf32>
    %cst_12 = arith.constant 1.000000e+00 : f32
    %19 = vector.broadcast %cst_12 : f32 to vector<10x512xf32>
    %20 = arith.addf %19, %18 : vector<10x512xf32>
    %21 = arith.divf %19, %20 : vector<10x512xf32>
    %22 = arith.select %16, %21, %13 : vector<10x512xi1>, vector<10x512xf32>
    %c0_13 = arith.constant 0 : index
    %c0_14 = arith.constant 0 : index
    %c0_15 = arith.constant 0 : index
    %23 = vector.load %arg7[%c0_13, %c0_14, %c0_15] : memref<1x10x512xf32, #tpu.memory_space<vmem>>, vector<1x10x512xf32>
    %24 = vector.shape_cast %23 : vector<1x10x512xf32> to vector<10x512xf32>
    %25 = vector.shape_cast %22 : vector<10x512xf32> to vector<1x10x512xf32>
    tpu.vector_store %arg7[%c0_13, %c0_14, %c0_15], %25 {strides = array<i32>} : memref<1x10x512xf32, #tpu.memory_space<vmem>>, vector<1x10x512xf32>,
    return
  }
  func.func @transform_0(%arg0: i32, %arg1: i32) -> (i32, i32, i32) {
    %c0_i32 = arith.constant 0 : i32
    %c0_i32_0 = arith.constant 0 : i32
    return %arg0, %c0_i32, %arg1 : i32, i32, i32
  }
  func.func @transform_1(%arg0: i32, %arg1: i32) -> (i32, i32) {
    %c0_i32 = arith.constant 0 : i32
    %c0_i32_0 = arith.constant 0 : i32
    %c0_i32_1 = arith.constant 0 : i32
    return %c0_i32, %c0_i32_0 : i32, i32
  }
  func.func @transform_2(%arg0: i32, %arg1: i32) -> (i32, i32) {
    %c0_i32 = arith.constant 0 : i32
    %c0_i32_0 = arith.constant 0 : i32
    %c0_i32_1 = arith.constant 0 : i32
    return %c0_i32, %c0_i32_0 : i32, i32
  }
  func.func @transform_3(%arg0: i32, %arg1: i32) -> (i32, i32) {
    %c0_i32 = arith.constant 0 : i32
    %c0_i32_0 = arith.constant 0 : i32
    %c0_i32_1 = arith.constant 0 : i32
    return %c0_i32, %c0_i32_0 : i32, i32
  }
  func.func @transform_4(%arg0: i32, %arg1: i32) -> (i32, i32) {
    %c0_i32 = arith.constant 0 : i32
    %c0_i32_0 = arith.constant 0 : i32
    %c0_i32_1 = arith.constant 0 : i32
    return %c0_i32, %c0_i32_0 : i32, i32
  }
  func.func @transform_5(%arg0: i32, %arg1: i32) -> (i32, i32, i32) {
    %c0_i32 = arith.constant 0 : i32
    %c0_i32_0 = arith.constant 0 : i32
    return %arg0, %c0_i32, %arg1 : i32, i32, i32
  }
}

</mosaic_0001>

<llo_original>
// kernel: head_forward.1
$region0: #{head_forward.1}
  #allocation0 [shape = 'u32[]', space=smem, size = 0x4, offset = 0x4, fixed_abs, tag = 'smem constant byte address 0x4 - core index']
  #allocation1 [shape = 'u32[72,128]{1,0:T(1,128)}', space=vmem, size = 0x9000, scoped, tag = 'internal scratch']
  %s0 = inlined_call_operand.vmem [shape: f32[2,432,512], index: 0, kind: input, shape index: {}]
  %s1 = inlined_call_operand.vmem [shape: f32[48,432], index: 1, kind: input, shape index: {}]
  %s2 = inlined_call_operand.vmem [shape: f32[48,1], index: 2, kind: input, shape index: {}]
  %s3 = inlined_call_operand.vmem [shape: f32[10,48], index: 3, kind: input, shape index: {}]
  %s4 = inlined_call_operand.vmem [shape: f32[10,1], index: 4, kind: input, shape index: {}]
  %s5 = inlined_call_operand.vmem [shape: f32[2,10,512], index: 5, kind: output, shape index: {}]
  %s6 = sld [smem:[#allocation0]]
  $region53: #{head_forward.1} parent=0
    _
  %s8 = ssub.s32 1, %s6
  %s9 = scalar_select 0, %s8, %s6
  loop: start=0, step=1, limit=4
  $region2: #{head_forward.1} parent=0 // loop_pre_header
    _
  $region3: #{head_forward.1} parent=0 // loop_header
    %s11 = sphi 0, %s15
    %p12 = scmp.ge.s32.totalorder %s11, 4
    %s18 = sphi 0, %s30
    %s19 = sphi 0, %s26
    %s20 = sphi 0, %s18
    %s21 = sphi 0, %s19
    %s22 = sphi 0, %s20
    %s23 = sphi 0, %s21
    %s35 = sphi 0, %s37
    %s38 = sphi 0, %s35
    %s39 = sphi 0, %s38
    %s55 = sphi 0, %s39
    %s59 = sphi 0, %s59
    %s61 = sphi 0, %s59
    %s62 = sphi 0, %s61
    %s76 = sphi 0, %s62
    %s80 = sphi 0, %s80
    %s82 = sphi 0, %s80
    %s83 = sphi 0, %s82
    %s97 = sphi 0, %s83
    %s101 = sphi 0, %s101
    %s103 = sphi 0, %s101
    %s104 = sphi 0, %s103
    %s118 = sphi 0, %s104
    %s122 = sphi 0, %s122
    %s124 = sphi 0, %s122
    %s125 = sphi 0, %s124
    %s139 = sphi 0, %s125
    %s147 = sphi 0, %s149
    %s150 = sphi 0, %s147
    %s151 = sphi 0, %s150
    %s167 = sphi 0, %s151
  $region4: #{head_forward.1} parent=0 // loop_header_branch
    %14 = sbr.rel (%p12) target = $region8
  $region5: #{head_forward.1} parent=0 // loop_body
    %s16 = ssub.s32 %s11, 1
    %s17 = ssub.s32 %s11, 2
    %s24 = sadd.s32 1, %s19
    %p25 = scmp.ge.s32.totalorder %s24, 1
    %s26 = scalar_select %p25, 0, %s24
    %s27 = sadd.s32 1, %s18
    %s28 = scalar_select %p25, %s27, %s18
    %p29 = scmp.ge.s32.totalorder %s28, 2
    %s30 = scalar_select %p29, 0, %s28
    %s31 = ssub.s32 %s18, %s30
    %s32 = ssub.s32 %s19, %s26
    %s33 = sor.u32 %s31, %s32
    %p34 = scmp.eq.s32.totalorder %s33, 0
    %s36 = sadd.s32 %s35, 1
    %s37 = scalar_select %p34, %s35, %s36
    %p40 = pneg %p34
    %p41 = scmp.eq.s32.totalorder %s11, 1
    %p42 = por %p40, %p41
    %p43 = scmp.ne.s32.totalorder %s35, %s38
    %p44 = scmp.eq.s32.totalorder %s11, 0
    %p45 = por %p43, %p44
    %p46 = scmp.ne.s32.totalorder %s35, %s38
    %p47 = scmp.eq.s32.totalorder %s16, 1
    %p48 = por %p46, %p47
    %p49 = scmp.ne.s32.totalorder %s38, %s39
    %p50 = scmp.eq.s32.totalorder %s16, 0
    %p51 = por %p49, %p50
    %p52 = scmp.ne.s32.totalorder %s38, %s39
    %p53 = scmp.eq.s32.totalorder %s17, 1
    %p54 = por %p52, %p53
    %p56 = scmp.ne.s32.totalorder %s39, %s55
    %p57 = scmp.eq.s32.totalorder %s17, 0
    %p58 = por %p56, %p57
    %s60 = sadd.s32 %s59, 1
    %p63 = scmp.eq.s32.totalorder %s11, 1
    %p64 = scmp.ne.s32.totalorder %s59, %s61
    %p65 = scmp.eq.s32.totalorder %s11, 0
    %p66 = por %p64, %p65
    %p67 = scmp.ne.s32.totalorder %s59, %s61
    %p68 = scmp.eq.s32.totalorder %s16, 1
    %p69 = por %p67, %p68
    %p70 = scmp.ne.s32.totalorder %s61, %s62
    %p71 = scmp.eq.s32.totalorder %s16, 0
    %p72 = por %p70, %p71
    %p73 = scmp.ne.s32.totalorder %s61, %s62
    %p74 = scmp.eq.s32.totalorder %s17, 1
    %p75 = por %p73, %p74
    %p77 = scmp.ne.s32.totalorder %s62, %s76
    %p78 = scmp.eq.s32.totalorder %s17, 0
    %p79 = por %p77, %p78
    %s81 = sadd.s32 %s80, 1
    %p84 = scmp.eq.s32.totalorder %s11, 1
    %p85 = scmp.ne.s32.totalorder %s80, %s82
    %p86 = scmp.eq.s32.totalorder %s11, 0
    %p87 = por %p85, %p86
    %p88 = scmp.ne.s32.totalorder %s80, %s82
    %p89 = scmp.eq.s32.totalorder %s16, 1
    %p90 = por %p88, %p89
    %p91 = scmp.ne.s32.totalorder %s82, %s83
    %p92 = scmp.eq.s32.totalorder %s16, 0
    %p93 = por %p91, %p92
    %p94 = scmp.ne.s32.totalorder %s82, %s83
    %p95 = scmp.eq.s32.totalorder %s17, 1
    %p96 = por %p94, %p95
    %p98 = scmp.ne.s32.totalorder %s83, %s97
    %p99 = scmp.eq.s32.totalorder %s17, 0
    %p100 = por %p98, %p99
    %s102 = sadd.s32 %s101, 1
    %p105 = scmp.eq.s32.totalorder %s11, 1
    %p106 = scmp.ne.s32.totalorder %s101, %s103
    %p107 = scmp.eq.s32.totalorder %s11, 0
    %p108 = por %p106, %p107
    %p109 = scmp.ne.s32.totalorder %s101, %s103
    %p110 = scmp.eq.s32.totalorder %s16, 1
    %p111 = por %p109, %p110
    %p112 = scmp.ne.s32.totalorder %s103, %s104
    %p113 = scmp.eq.s32.totalorder %s16, 0
    %p114 = por %p112, %p113
    %p115 = scmp.ne.s32.totalorder %s103, %s104
    %p116 = scmp.eq.s32.totalorder %s17, 1
    %p117 = por %p115, %p116
    %p119 = scmp.ne.s32.totalorder %s104, %s118
    %p120 = scmp.eq.s32.totalorder %s17, 0
    %p121 = por %p119, %p120
    %s123 = sadd.s32 %s122, 1
    %p126 = scmp.eq.s32.totalorder %s11, 1
    %p127 = scmp.ne.s32.totalorder %s122, %s124
    %p128 = scmp.eq.s32.totalorder %s11, 0
    %p129 = por %p127, %p128
    %p130 = scmp.ne.s32.totalorder %s122, %s124
    %p131 = scmp.eq.s32.totalorder %s16, 1
    %p132 = por %p130, %p131
    %p133 = scmp.ne.s32.totalorder %s124, %s125
    %p134 = scmp.eq.s32.totalorder %s16, 0
    %p135 = por %p133, %p134
    %p136 = scmp.ne.s32.totalorder %s124, %s125
    %p137 = scmp.eq.s32.totalorder %s17, 1
    %p138 = por %p136, %p137
    %p140 = scmp.ne.s32.totalorder %s125, %s139
    %p141 = scmp.eq.s32.totalorder %s17, 0
    %p142 = por %p140, %p141
    %s143 = ssub.s32 %s18, %s30
    %s144 = ssub.s32 %s19, %s26
    %s145 = sor.u32 %s143, %s144
    %p146 = scmp.eq.s32.totalorder %s145, 0
    %s148 = sadd.s32 %s147, 1
    %s149 = scalar_select %p146, %s147, %s148
    %p152 = pneg %p146
    %p153 = scmp.eq.s32.totalorder %s11, 1
    %p154 = por %p152, %p153
    %p155 = scmp.ne.s32.totalorder %s147, %s150
    %p156 = scmp.eq.s32.totalorder %s11, 0
    %p157 = por %p155, %p156
    %p158 = scmp.ne.s32.totalorder %s147, %s150
    %p159 = scmp.eq.s32.totalorder %s16, 1
    %p160 = por %p158, %p159
    %p161 = scmp.ne.s32.totalorder %s150, %s151
    %p162 = scmp.eq.s32.totalorder %s16, 0
    %p163 = por %p161, %p162
    %p164 = scmp.ne.s32.totalorder %s150, %s151
    %p165 = scmp.eq.s32.totalorder %s17, 1
    %p166 = por %p164, %p165
    %p168 = scmp.ne.s32.totalorder %s151, %s167
    %p169 = scmp.eq.s32.totalorder %s17, 0
    %p170 = por %p168, %p169
    %p171 = scmp.le.s32.totalorder 1, %s11
    %p172 = scmp.lt.s32.totalorder %s11, 3
    %p173 = pnand %p171, %p172
    %p174 = pneg %p173
    // Predicated region
    $region9: #{head_forward.1} parent=5 // pred_check
      _
    $region10: #{head_forward.1} parent=5 // pred_check_branch
      %176 = sbr.rel (%p173) target = $region12
    $region11: #{head_forward.1} parent=5 // pred_region
      %s177 = ssub.s32 %s11, 1
      // Predicated region
      $region13: #{head_forward.1} parent=11 // pred_check
        %p178 = pneg %p72
      $region14: #{head_forward.1} parent=11 // pred_check_branch
        %180 = sbr.rel (%p178) target = $region16
      $region15: #{head_forward.1} parent=11 // pred_region
        _
      $region16: #{head_forward.1} parent=11 // pred_fallthru
        _
      // Predicated region
      $region17: #{head_forward.1} parent=11 // pred_check
        %p181 = pneg %p93
      $region18: #{head_forward.1} parent=11 // pred_check_branch
        %183 = sbr.rel (%p181) target = $region20
      $region19: #{head_forward.1} parent=11 // pred_region
        _
      $region20: #{head_forward.1} parent=11 // pred_fallthru
        _
      // Predicated region
      $region21: #{head_forward.1} parent=11 // pred_check
        %p184 = pneg %p114
      $region22: #{head_forward.1} parent=11 // pred_check_branch
        %186 = sbr.rel (%p184) target = $region24
      $region23: #{head_forward.1} parent=11 // pred_region
        _
      $region24: #{head_forward.1} parent=11 // pred_fallthru
        _
      // Predicated region
      $region25: #{head_forward.1} parent=11 // pred_check
        %p187 = pneg %p135
      $region26: #{head_forward.1} parent=11 // pred_check_branch
        %189 = sbr.rel (%p187) target = $region28
      $region27: #{head_forward.1} parent=11 // pred_region
        _
      $region28: #{head_forward.1} parent=11 // pred_fallthru
        _
    $region12: #{head_forward.1} parent=5 // pred_fallthru
      _
    %p190 = scmp.lt.s32.totalorder %s11, 2
    // Predicated region
    $region29: #{head_forward.1} parent=5 // pred_check
      %p191 = pneg %p190
    $region30: #{head_forward.1} parent=5 // pred_check_branch
      %193 = sbr.rel (%p191) target = $region32
    $region31: #{head_forward.1} parent=5 // pred_region
      // Predicated region
      $region33: #{head_forward.1} parent=31 // pred_check
        %p194 = pneg %p45
      $region34: #{head_forward.1} parent=31 // pred_check_branch
        %196 = sbr.rel (%p194) target = $region36
      $region35: #{head_forward.1} parent=31 // pred_region
        %s197 = smul.u32 4, %s19
        %p198 = scmp.lt.s32.totalorder %s18, 1
        %s199 = scalar_select %p198, %s18, 1
        %p200 = scmp.lt.s32.totalorder %s197, 3
        %s201 = scalar_select %p200, %s197, 3
        %s202 = smul.addr %s199, 216
        %s203 = sadd.s32 %s201, %s202
        %s204 = smul.addr %s203, 8
        %s205 = scalar_lea.vmem %s0, %s204
        %s206 = smul.u32 4, %s19
      $region36: #{head_forward.1} parent=31 // pred_fallthru
        _
    $region32: #{head_forward.1} parent=5 // pred_fallthru
      _
    %p207 = scmp.le.s32.totalorder 1, %s11
    %p208 = scmp.lt.s32.totalorder %s11, 3
    %p209 = pnand %p207, %p208
    %p210 = pneg %p209
    // Predicated region
    $region37: #{head_forward.1} parent=5 // pred_check
      _
    $region38: #{head_forward.1} parent=5 // pred_check_branch
      %212 = sbr.rel (%p209) target = $region40
    $region39: #{head_forward.1} parent=5 // pred_region
      %s213 = ssub.s32 %s11, 1
      %s214 = smul.u32 4, %s21
      %p215 = scmp.lt.s32.totalorder %s20, 1
      %s216 = scalar_select %p215, %s20, 1
      %p217 = scmp.lt.s32.totalorder %s214, 3
      %s218 = scalar_select %p217, %s214, 3
      %s219 = smul.addr %s216, 216
      %s220 = sadd.s32 %s218, %s219
      %s221 = smul.addr %s220, 8
      %s222 = scalar_lea.vmem %s0, %s221
      %p223 = pneg %p51
      %p224 = pneg %p48
      %p225 = pneg %p72
      %p226 = pneg %p69
      %p227 = pneg %p93
      %p228 = pneg %p90
      %p229 = pneg %p114
      %p230 = pneg %p111
      %p231 = pneg %p135
      %p232 = pneg %p132
      %p233 = pneg %p163
      %p234 = pneg %p160
      %s235 = smul.u32 4, %s21
      %p236 = scmp.lt.s32.totalorder %s20, 1
      %s237 = scalar_select %p236, %s20, 1
      %p238 = scmp.lt.s32.totalorder %s235, 3
      %s239 = scalar_select %p238, %s235, 3
      %s240 = smul.addr %s237, 8
      %s241 = sadd.s32 %s239, %s240
      %s242 = smul.addr %s241, 8
      %s243 = scalar_lea.vmem %s5, %s242
      %s244 = smul.u32 4, %s21
      %p245 = scmp.lt.s32.totalorder %s20, 1
      %s246 = scalar_select %p245, %s20, 1
      %p247 = scmp.lt.s32.totalorder %s244, 3
      %s248 = scalar_select %p247, %s244, 3
      %s249 = smul.addr %s246, 216
      %s250 = sadd.s32 %s248, %s249
      %s251 = smul.addr %s250, 8
      %s252 = scalar_lea.vmem %s0, %s251
      %s253 = smul.u32 4, %s21
      %s254 = smul.u32 4, %s21
      %p255 = scmp.lt.s32.totalorder %s20, 1
      %s256 = scalar_select %p255, %s20, 1
      %p257 = scmp.lt.s32.totalorder %s254, 3
      %s258 = scalar_select %p257, %s254, 3
      %s259 = smul.addr %s256, 8
      %s260 = sadd.s32 %s258, %s259
      %s261 = smul.addr %s260, 8
      %s262 = scalar_lea.vmem %s5, %s261
      %s263 = smul.u32 4, %s21
      %v264 = vld [vmem:[%s252] sm:$0xff]
      %v265 = vld [vmem:[%s252 + $0x8] sm:$0xff]
      %v266 = vld [vmem:[%s252 + $0x10] sm:$0xff]
      %v267 = vld [vmem:[%s252 + $0x18] sm:$0xff]
      %v268 = vld [vmem:[%s252 + $0x20] sm:$0xff]
      %v269 = vld [vmem:[%s252 + $0x28] sm:$0xff]
      %v270 = vld [vmem:[%s252 + $0x30] sm:$0xff]
      %v271 = vld [vmem:[%s252 + $0x38] sm:$0xff]
      %v272 = vld [vmem:[%s252 + $0x40] sm:$0xff]
      %v273 = vld [vmem:[%s252 + $0x48] sm:$0xff]
      %v274 = vld [vmem:[%s252 + $0x50] sm:$0xff]
      %v275 = vld [vmem:[%s252 + $0x58] sm:$0xff]
      %v276 = vld [vmem:[%s252 + $0x60] sm:$0xff]
      %v277 = vld [vmem:[%s252 + $0x68] sm:$0xff]
      %v278 = vld [vmem:[%s252 + $0x70] sm:$0xff]
      %v279 = vld [vmem:[%s252 + $0x78] sm:$0xff]
      %v280 = vld [vmem:[%s252 + $0x80] sm:$0xff]
      %v281 = vld [vmem:[%s252 + $0x88] sm:$0xff]
      %v282 = vld [vmem:[%s252 + $0x90] sm:$0xff]
      %v283 = vld [vmem:[%s252 + $0x98] sm:$0xff]
      %v284 = vld [vmem:[%s252 + $0xa0] sm:$0xff]
      %v285 = vld [vmem:[%s252 + $0xa8] sm:$0xff]
      %v286 = vld [vmem:[%s252 + $0xb0] sm:$0xff]
      %v287 = vld [vmem:[%s252 + $0xb8] sm:$0xff]
      %v288 = vld [vmem:[%s252 + $0xc0] sm:$0xff]
      %v289 = vld [vmem:[%s252 + $0xc8] sm:$0xff]
      %v290 = vld [vmem:[%s252 + $0xd0] sm:$0xff]
      %v291 = vld [vmem:[%s252 + $0xd8] sm:$0xff]
      %v292 = vld [vmem:[%s252 + $0xe0] sm:$0xff]
      %v293 = vld [vmem:[%s252 + $0xe8] sm:$0xff]
      %v294 = vld [vmem:[%s252 + $0xf0] sm:$0xff]
      %v295 = vld [vmem:[%s252 + $0xf8] sm:$0xff]
      %v296 = vld [vmem:[%s252 + $0x100] sm:$0xff]
      %v297 = vld [vmem:[%s252 + $0x108] sm:$0xff]
      %v298 = vld [vmem:[%s252 + $0x110] sm:$0xff]
      %v299 = vld [vmem:[%s252 + $0x118] sm:$0xff]
      %v300 = vld [vmem:[%s252 + $0x120] sm:$0xff]
      %v301 = vld [vmem:[%s252 + $0x128] sm:$0xff]
      %v302 = vld [vmem:[%s252 + $0x130] sm:$0xff]
      %v303 = vld [vmem:[%s252 + $0x138] sm:$0xff]
      %v304 = vld [vmem:[%s252 + $0x140] sm:$0xff]
      %v305 = vld [vmem:[%s252 + $0x148] sm:$0xff]
      %v306 = vld [vmem:[%s252 + $0x150] sm:$0xff]
      %v307 = vld [vmem:[%s252 + $0x158] sm:$0xff]
      %v308 = vld [vmem:[%s252 + $0x160] sm:$0xff]
      %v309 = vld [vmem:[%s252 + $0x168] sm:$0xff]
      %v310 = vld [vmem:[%s252 + $0x170] sm:$0xff]
      %v311 = vld [vmem:[%s252 + $0x178] sm:$0xff]
      %v312 = vld [vmem:[%s252 + $0x180] sm:$0xff]
      %v313 = vld [vmem:[%s252 + $0x188] sm:$0xff]
      %v314 = vld [vmem:[%s252 + $0x190] sm:$0xff]
      %v315 = vld [vmem:[%s252 + $0x198] sm:$0xff]
      %v316 = vld [vmem:[%s252 + $0x1a0] sm:$0xff]
      %v317 = vld [vmem:[%s252 + $0x1a8] sm:$0xff]
      %v318 = vld [vmem:[%s252 + $0x1b0] sm:$0xff]
      %v319 = vld [vmem:[%s252 + $0x1b8] sm:$0xff]
      %v320 = vld [vmem:[%s252 + $0x1c0] sm:$0xff]
      %v321 = vld [vmem:[%s252 + $0x1c8] sm:$0xff]
      %v322 = vld [vmem:[%s252 + $0x1d0] sm:$0xff]
      %v323 = vld [vmem:[%s252 + $0x1d8] sm:$0xff]
      %v324 = vld [vmem:[%s252 + $0x1e0] sm:$0xff]
      %v325 = vld [vmem:[%s252 + $0x1e8] sm:$0xff]
      %v326 = vld [vmem:[%s252 + $0x1f0] sm:$0xff]
      %v327 = vld [vmem:[%s252 + $0x1f8] sm:$0xff]
      %v328 = vld [vmem:[%s252 + $0x200] sm:$0xff]
      %v329 = vld [vmem:[%s252 + $0x208] sm:$0xff]
      %v330 = vld [vmem:[%s252 + $0x210] sm:$0xff]
      %v331 = vld [vmem:[%s252 + $0x218] sm:$0xff]
      %v332 = vld [vmem:[%s252 + $0x220] sm:$0xff]
      %v333 = vld [vmem:[%s252 + $0x228] sm:$0xff]
      %v334 = vld [vmem:[%s252 + $0x230] sm:$0xff]
      %v335 = vld [vmem:[%s252 + $0x238] sm:$0xff]
      %v336 = vld [vmem:[%s252 + $0x240] sm:$0xff]
      %v337 = vld [vmem:[%s252 + $0x248] sm:$0xff]
      %v338 = vld [vmem:[%s252 + $0x250] sm:$0xff]
      %v339 = vld [vmem:[%s252 + $0x258] sm:$0xff]
      %v340 = vld [vmem:[%s252 + $0x260] sm:$0xff]
      %v341 = vld [vmem:[%s252 + $0x268] sm:$0xff]
      %v342 = vld [vmem:[%s252 + $0x270] sm:$0xff]
      %v343 = vld [vmem:[%s252 + $0x278] sm:$0xff]
      %v344 = vld [vmem:[%s252 + $0x280] sm:$0xff]
      %v345 = vld [vmem:[%s252 + $0x288] sm:$0xff]
      %v346 = vld [vmem:[%s252 + $0x290] sm:$0xff]
      %v347 = vld [vmem:[%s252 + $0x298] sm:$0xff]
      %v348 = vld [vmem:[%s252 + $0x2a0] sm:$0xff]
      %v349 = vld [vmem:[%s252 + $0x2a8] sm:$0xff]
      %v350 = vld [vmem:[%s252 + $0x2b0] sm:$0xff]
      %v351 = vld [vmem:[%s252 + $0x2b8] sm:$0xff]
      %v352 = vld [vmem:[%s252 + $0x2c0] sm:$0xff]
      %v353 = vld [vmem:[%s252 + $0x2c8] sm:$0xff]
      %v354 = vld [vmem:[%s252 + $0x2d0] sm:$0xff]
      %v355 = vld [vmem:[%s252 + $0x2d8] sm:$0xff]
      %v356 = vld [vmem:[%s252 + $0x2e0] sm:$0xff]
      %v357 = vld [vmem:[%s252 + $0x2e8] sm:$0xff]
      %v358 = vld [vmem:[%s252 + $0x2f0] sm:$0xff]
      %v359 = vld [vmem:[%s252 + $0x2f8] sm:$0xff]
      %v360 = vld [vmem:[%s252 + $0x300] sm:$0xff]
      %v361 = vld [vmem:[%s252 + $0x308] sm:$0xff]
      %v362 = vld [vmem:[%s252 + $0x310] sm:$0xff]
      %v363 = vld [vmem:[%s252 + $0x318] sm:$0xff]
      %v364 = vld [vmem:[%s252 + $0x320] sm:$0xff]
      %v365 = vld [vmem:[%s252 + $0x328] sm:$0xff]
      %v366 = vld [vmem:[%s252 + $0x330] sm:$0xff]
      %v367 = vld [vmem:[%s252 + $0x338] sm:$0xff]
      %v368 = vld [vmem:[%s252 + $0x340] sm:$0xff]
      %v369 = vld [vmem:[%s252 + $0x348] sm:$0xff]
      %v370 = vld [vmem:[%s252 + $0x350] sm:$0xff]
      %v371 = vld [vmem:[%s252 + $0x358] sm:$0xff]
      %v372 = vld [vmem:[%s252 + $0x360] sm:$0xff]
      %v373 = vld [vmem:[%s252 + $0x368] sm:$0xff]
      %v374 = vld [vmem:[%s252 + $0x370] sm:$0xff]
      %v375 = vld [vmem:[%s252 + $0x378] sm:$0xff]
      %v376 = vld [vmem:[%s252 + $0x380] sm:$0xff]
      %v377 = vld [vmem:[%s252 + $0x388] sm:$0xff]
      %v378 = vld [vmem:[%s252 + $0x390] sm:$0xff]
      %v379 = vld [vmem:[%s252 + $0x398] sm:$0xff]
      %v380 = vld [vmem:[%s252 + $0x3a0] sm:$0xff]
      %v381 = vld [vmem:[%s252 + $0x3a8] sm:$0xff]
      %v382 = vld [vmem:[%s252 + $0x3b0] sm:$0xff]
      %v383 = vld [vmem:[%s252 + $0x3b8] sm:$0xff]
      %v384 = vld [vmem:[%s252 + $0x3c0] sm:$0xff]
      %v385 = vld [vmem:[%s252 + $0x3c8] sm:$0xff]
      %v386 = vld [vmem:[%s252 + $0x3d0] sm:$0xff]
      %v387 = vld [vmem:[%s252 + $0x3d8] sm:$0xff]
      %v388 = vld [vmem:[%s252 + $0x3e0] sm:$0xff]
      %v389 = vld [vmem:[%s252 + $0x3e8] sm:$0xff]
      %v390 = vld [vmem:[%s252 + $0x3f0] sm:$0xff]
      %v391 = vld [vmem:[%s252 + $0x3f8] sm:$0xff]
      %v392 = vld [vmem:[%s252 + $0x400] sm:$0xff]
      %v393 = vld [vmem:[%s252 + $0x408] sm:$0xff]
      %v394 = vld [vmem:[%s252 + $0x410] sm:$0xff]
      %v395 = vld [vmem:[%s252 + $0x418] sm:$0xff]
      %v396 = vld [vmem:[%s252 + $0x420] sm:$0xff]
      %v397 = vld [vmem:[%s252 + $0x428] sm:$0xff]
      %v398 = vld [vmem:[%s252 + $0x430] sm:$0xff]
      %v399 = vld [vmem:[%s252 + $0x438] sm:$0xff]
      %v400 = vld [vmem:[%s252 + $0x440] sm:$0xff]
      %v401 = vld [vmem:[%s252 + $0x448] sm:$0xff]
      %v402 = vld [vmem:[%s252 + $0x450] sm:$0xff]
      %v403 = vld [vmem:[%s252 + $0x458] sm:$0xff]
      %v404 = vld [vmem:[%s252 + $0x460] sm:$0xff]
      %v405 = vld [vmem:[%s252 + $0x468] sm:$0xff]
      %v406 = vld [vmem:[%s252 + $0x470] sm:$0xff]
      %v407 = vld [vmem:[%s252 + $0x478] sm:$0xff]
      %v408 = vld [vmem:[%s252 + $0x480] sm:$0xff]
      %v409 = vld [vmem:[%s252 + $0x488] sm:$0xff]
      %v410 = vld [vmem:[%s252 + $0x490] sm:$0xff]
      %v411 = vld [vmem:[%s252 + $0x498] sm:$0xff]
      %v412 = vld [vmem:[%s252 + $0x4a0] sm:$0xff]
      %v413 = vld [vmem:[%s252 + $0x4a8] sm:$0xff]
      %v414 = vld [vmem:[%s252 + $0x4b0] sm:$0xff]
      %v415 = vld [vmem:[%s252 + $0x4b8] sm:$0xff]
      %v416 = vld [vmem:[%s252 + $0x4c0] sm:$0xff]
      %v417 = vld [vmem:[%s252 + $0x4c8] sm:$0xff]
      %v418 = vld [vmem:[%s252 + $0x4d0] sm:$0xff]
      %v419 = vld [vmem:[%s252 + $0x4d8] sm:$0xff]
      %v420 = vld [vmem:[%s252 + $0x4e0] sm:$0xff]
      %v421 = vld [vmem:[%s252 + $0x4e8] sm:$0xff]
      %v422 = vld [vmem:[%s252 + $0x4f0] sm:$0xff]
      %v423 = vld [vmem:[%s252 + $0x4f8] sm:$0xff]
      %v424 = vld [vmem:[%s252 + $0x500] sm:$0xff]
      %v425 = vld [vmem:[%s252 + $0x508] sm:$0xff]
      %v426 = vld [vmem:[%s252 + $0x510] sm:$0xff]
      %v427 = vld [vmem:[%s252 + $0x518] sm:$0xff]
      %v428 = vld [vmem:[%s252 + $0x520] sm:$0xff]
      %v429 = vld [vmem:[%s252 + $0x528] sm:$0xff]
      %v430 = vld [vmem:[%s252 + $0x530] sm:$0xff]
      %v431 = vld [vmem:[%s252 + $0x538] sm:$0xff]
      %v432 = vld [vmem:[%s252 + $0x540] sm:$0xff]
      %v433 = vld [vmem:[%s252 + $0x548] sm:$0xff]
      %v434 = vld [vmem:[%s252 + $0x550] sm:$0xff]
      %v435 = vld [vmem:[%s252 + $0x558] sm:$0xff]
      %v436 = vld [vmem:[%s252 + $0x560] sm:$0xff]
      %v437 = vld [vmem:[%s252 + $0x568] sm:$0xff]
      %v438 = vld [vmem:[%s252 + $0x570] sm:$0xff]
      %v439 = vld [vmem:[%s252 + $0x578] sm:$0xff]
      %v440 = vld [vmem:[%s252 + $0x580] sm:$0xff]
      %v441 = vld [vmem:[%s252 + $0x588] sm:$0xff]
      %v442 = vld [vmem:[%s252 + $0x590] sm:$0xff]
      %v443 = vld [vmem:[%s252 + $0x598] sm:$0xff]
      %v444 = vld [vmem:[%s252 + $0x5a0] sm:$0xff]
      %v445 = vld [vmem:[%s252 + $0x5a8] sm:$0xff]
      %v446 = vld [vmem:[%s252 + $0x5b0] sm:$0xff]
      %v447 = vld [vmem:[%s252 + $0x5b8] sm:$0xff]
      %v448 = vld [vmem:[%s252 + $0x5c0] sm:$0xff]
      %v449 = vld [vmem:[%s252 + $0x5c8] sm:$0xff]
      %v450 = vld [vmem:[%s252 + $0x5d0] sm:$0xff]
      %v451 = vld [vmem:[%s252 + $0x5d8] sm:$0xff]
      %v452 = vld [vmem:[%s252 + $0x5e0] sm:$0xff]
      %v453 = vld [vmem:[%s252 + $0x5e8] sm:$0xff]
      %v454 = vld [vmem:[%s252 + $0x5f0] sm:$0xff]
      %v455 = vld [vmem:[%s252 + $0x5f8] sm:$0xff]
      %v456 = vld [vmem:[%s252 + $0x600] sm:$0xff]
      %v457 = vld [vmem:[%s252 + $0x608] sm:$0xff]
      %v458 = vld [vmem:[%s252 + $0x610] sm:$0xff]
      %v459 = vld [vmem:[%s252 + $0x618] sm:$0xff]
      %v460 = vld [vmem:[%s252 + $0x620] sm:$0xff]
      %v461 = vld [vmem:[%s252 + $0x628] sm:$0xff]
      %v462 = vld [vmem:[%s252 + $0x630] sm:$0xff]
      %v463 = vld [vmem:[%s252 + $0x638] sm:$0xff]
      %v464 = vld [vmem:[%s252 + $0x640] sm:$0xff]
      %v465 = vld [vmem:[%s252 + $0x648] sm:$0xff]
      %v466 = vld [vmem:[%s252 + $0x650] sm:$0xff]
      %v467 = vld [vmem:[%s252 + $0x658] sm:$0xff]
      %v468 = vld [vmem:[%s252 + $0x660] sm:$0xff]
      %v469 = vld [vmem:[%s252 + $0x668] sm:$0xff]
      %v470 = vld [vmem:[%s252 + $0x670] sm:$0xff]
      %v471 = vld [vmem:[%s252 + $0x678] sm:$0xff]
      %v472 = vld [vmem:[%s252 + $0x680] sm:$0xff]
      %v473 = vld [vmem:[%s252 + $0x688] sm:$0xff]
      %v474 = vld [vmem:[%s252 + $0x690] sm:$0xff]
      %v475 = vld [vmem:[%s252 + $0x698] sm:$0xff]
      %v476 = vld [vmem:[%s252 + $0x6a0] sm:$0xff]
      %v477 = vld [vmem:[%s252 + $0x6a8] sm:$0xff]
      %v478 = vld [vmem:[%s252 + $0x6b0] sm:$0xff]
      %v479 = vld [vmem:[%s252 + $0x6b8] sm:$0xff]
      %v480 = vld [vmem:[%s1] sm:$0xff]
      %v481 = vld [vmem:[%s1 + $0x8] sm:$0xff]
      %v482 = vld [vmem:[%s1 + $0x10] sm:$0xff]
      %v483 = vld [vmem:[%s1 + $0x18] sm:$0xff]
      %v484 = vld [vmem:[%s1 + $0x20] sm:$0xff]
      %v485 = vld [vmem:[%s1 + $0x28] sm:$0xff]
      %v486 = vld [vmem:[%s1 + $0x30] sm:$0xff]
      %v487 = vld [vmem:[%s1 + $0x38] sm:$0xff]
      %v488 = vld [vmem:[%s1 + $0x40] sm:$0xff]
      %v489 = vld [vmem:[%s1 + $0x48] sm:$0xff]
      %v490 = vld [vmem:[%s1 + $0x50] sm:$0xff]
      %v491 = vld [vmem:[%s1 + $0x58] sm:$0xff]
      %v492 = vld [vmem:[%s1 + $0x60] sm:$0xff]
      %v493 = vld [vmem:[%s1 + $0x68] sm:$0xff]
      %v494 = vld [vmem:[%s1 + $0x70] sm:$0xff]
      %v495 = vld [vmem:[%s1 + $0x78] sm:$0xff]
      %v496 = vld [vmem:[%s1 + $0x80] sm:$0xff]
      %v497 = vld [vmem:[%s1 + $0x88] sm:$0xff]
      %v498 = vld [vmem:[%s1 + $0x90] sm:$0xff]
      %v499 = vld [vmem:[%s1 + $0x98] sm:$0xff]
      %v500 = vld [vmem:[%s1 + $0xa0] sm:$0xff]
      %v501 = vld [vmem:[%s1 + $0xa8] sm:$0xff]
      %v502 = vld [vmem:[%s1 + $0xb0] sm:$0xff]
      %v503 = vld [vmem:[%s1 + $0xb8] sm:$0xff]
      %v504 = vld [vmem:[%s2] sm:$0xff]
      %v505 = vld [vmem:[%s2 + $0x8] sm:$0xff]
      %v506 = vld [vmem:[%s2 + $0x10] sm:$0xff]
      %v507 = vld [vmem:[%s2 + $0x18] sm:$0xff]
      %v508 = vld [vmem:[%s2 + $0x20] sm:$0xff]
      %v509 = vld [vmem:[%s2 + $0x28] sm:$0xff]
      %511 = vset.pattern.permute.xlu0 0
      %512 = vperm.xlu0 %511, %v504
      %v513 = vpop.permute.xlu0 %512
      %516 = vset.pattern.permute.xlu0 0
      %517 = vperm.xlu0 %516, %v505
      %v518 = vpop.permute.xlu0 %517
      %521 = vset.pattern.permute.xlu0 0
      %522 = vperm.xlu0 %521, %v506
      %v523 = vpop.permute.xlu0 %522
      %526 = vset.pattern.permute.xlu0 0
      %527 = vperm.xlu0 %526, %v507
      %v528 = vpop.permute.xlu0 %527
      %531 = vset.pattern.permute.xlu0 0
      %532 = vperm.xlu0 %531, %v508
      %v533 = vpop.permute.xlu0 %532
      %536 = vset.pattern.permute.xlu0 0
      %537 = vperm.xlu0 %536, %v509
      %v538 = vpop.permute.xlu0 %537
      %vm540 = vcmask 392192
      %v542 = vsel %vm540, %v483, 0
      %v545 = vsel %vm540, %v487, 0
      %v548 = vsel %vm540, %v491, 0
      %v551 = vsel %vm540, %v495, 0
      %v554 = vsel %vm540, %v499, 0
      %v557 = vsel %vm540, %v503, 0
      %559 = vmatpush.msra.mxu0 %v324
      %560 = vmatpush.msra.mxu0 %v320
      %561 = vmatpush.msra.mxu0 %v316
      %562 = vmatpush.msra.mxu0 %v312
      %563 = vmatpush.msra.mxu0 %v308
      %564 = vmatpush.msra.mxu0 %v304
      %565 = vmatpush.msra.mxu0 %v300
      %566 = vmatpush.msra.mxu0 %v296
      %567 = vmatpush.msra.mxu0 %v292
      %568 = vmatpush.msra.mxu0 %v288
      %569 = vmatpush.msra.mxu0 %v284
      %570 = vmatpush.msra.mxu0 %v280
      %571 = vmatpush.msra.mxu0 %v276
      %572 = vmatpush.msra.mxu0 %v272
      %573 = vmatpush.msra.mxu0 %v268
      %574 = vmatpush.msra.mxu0 %v264
      %575 = vmatmul.f32.gmra.mxu0 %v480
      %v576 = vpop.f32.mrf.mxu0
      %v577 = vadd.f32 %v513, %v576
      %578 = vmatmul.f32.gmra.mxu0 %v484
      %v579 = vpop.f32.mrf.mxu0
      %v580 = vadd.f32 %v518, %v579
      %581 = vmatmul.f32.gmra.mxu0 %v488
      %v582 = vpop.f32.mrf.mxu0
      %v583 = vadd.f32 %v523, %v582
      %584 = vmatmul.f32.gmra.mxu0 %v492
      %v585 = vpop.f32.mrf.mxu0
      %v586 = vadd.f32 %v528, %v585
      %587 = vmatmul.f32.gmra.mxu0 %v496
      %v588 = vpop.f32.mrf.mxu0
      %v589 = vadd.f32 %v533, %v588
      %590 = vmatmul.f32.gmra.mxu0 %v500
      %v591 = vpop.f32.mrf.mxu0
      %v592 = vadd.f32 %v538, %v591
      %593 = vdwg.mxu0
      %594 = vmatpush.msra.mxu0 %v388
      %595 = vmatpush.msra.mxu0 %v384
      %596 = vmatpush.msra.mxu0 %v380
      %597 = vmatpush.msra.mxu0 %v376
      %598 = vmatpush.msra.mxu0 %v372
      %599 = vmatpush.msra.mxu0 %v368
      %600 = vmatpush.msra.mxu0 %v364
      %601 = vmatpush.msra.mxu0 %v360
      %602 = vmatpush.msra.mxu0 %v356
      %603 = vmatpush.msra.mxu0 %v352
      %604 = vmatpush.msra.mxu0 %v348
      %605 = vmatpush.msra.mxu0 %v344
      %606 = vmatpush.msra.mxu0 %v340
      %607 = vmatpush.msra.mxu0 %v336
      %608 = vmatpush.msra.mxu0 %v332
      %609 = vmatpush.msra.mxu0 %v328
      %610 = vmatmul.f32.gmra.mxu0 %v481
      %v611 = vpop.f32.mrf.mxu0
      %v612 = vadd.f32 %v577, %v611
      %613 = vmatmul.f32.gmra.mxu0 %v485
      %v614 = vpop.f32.mrf.mxu0
      %v615 = vadd.f32 %v580, %v614
      %616 = vmatmul.f32.gmra.mxu0 %v489
      %v617 = vpop.f32.mrf.mxu0
      %v618 = vadd.f32 %v583, %v617
      %619 = vmatmul.f32.gmra.mxu0 %v493
      %v620 = vpop.f32.mrf.mxu0
      %v621 = vadd.f32 %v586, %v620
      %622 = vmatmul.f32.gmra.mxu0 %v497
      %v623 = vpop.f32.mrf.mxu0
      %v624 = vadd.f32 %v589, %v623
      %625 = vmatmul.f32.gmra.mxu0 %v501
      %v626 = vpop.f32.mrf.mxu0
      %v627 = vadd.f32 %v592, %v626
      %628 = vdwg.mxu0
      %629 = vmatpush.msra.mxu0 %v452
      %630 = vmatpush.msra.mxu0 %v448
      %631 = vmatpush.msra.mxu0 %v444
      %632 = vmatpush.msra.mxu0 %v440
      %633 = vmatpush.msra.mxu0 %v436
      %634 = vmatpush.msra.mxu0 %v432
      %635 = vmatpush.msra.mxu0 %v428
      %636 = vmatpush.msra.mxu0 %v424
      %637 = vmatpush.msra.mxu0 %v420
      %638 = vmatpush.msra.mxu0 %v416
      %639 = vmatpush.msra.mxu0 %v412
      %640 = vmatpush.msra.mxu0 %v408
      %641 = vmatpush.msra.mxu0 %v404
      %642 = vmatpush.msra.mxu0 %v400
      %643 = vmatpush.msra.mxu0 %v396
      %644 = vmatpush.msra.mxu0 %v392
      %645 = vmatmul.f32.gmra.mxu0 %v482
      %v646 = vpop.f32.mrf.mxu0
      %v647 = vadd.f32 %v612, %v646
      %648 = vmatmul.f32.gmra.mxu0 %v486
      %v649 = vpop.f32.mrf.mxu0
      %v650 = vadd.f32 %v615, %v649
      %651 = vmatmul.f32.gmra.mxu0 %v490
      %v652 = vpop.f32.mrf.mxu0
      %v653 = vadd.f32 %v618, %v652
      %654 = vmatmul.f32.gmra.mxu0 %v494
      %v655 = vpop.f32.mrf.mxu0
      %v656 = vadd.f32 %v621, %v655
      %657 = vmatmul.f32.gmra.mxu0 %v498
      %v658 = vpop.f32.mrf.mxu0
      %v659 = vadd.f32 %v624, %v658
      %660 = vmatmul.f32.gmra.mxu0 %v502
      %v661 = vpop.f32.mrf.mxu0
      %v662 = vadd.f32 %v627, %v661
      %663 = vdwg.mxu0
      %664 = vmatpush.msra.mxu0 0.0
      %665 = vmatpush.msra.mxu0 0.0
      %666 = vmatpush.msra.mxu0 0.0
      %667 = vmatpush.msra.mxu0 0.0
      %668 = vmatpush.msra.mxu0 0.0
      %669 = vmatpush.msra.mxu0 0.0
      %670 = vmatpush.msra.mxu0 0.0
      %671 = vmatpush.msra.mxu0 0.0
      %672 = vmatpush.msra.mxu0 0.0
      %673 = vmatpush.msra.mxu0 0.0
      %674 = vmatpush.msra.mxu0 %v476
      %675 = vmatpush.msra.mxu0 %v472
      %676 = vmatpush.msra.mxu0 %v468
      %677 = vmatpush.msra.mxu0 %v464
      %678 = vmatpush.msra.mxu0 %v460
      %679 = vmatpush.msra.mxu0 %v456
      %680 = vmatmul.f32.gmra.mxu0 %v542
      %v681 = vpop.f32.mrf.mxu0
      %v682 = vadd.f32 %v647, %v681
      %683 = vmatmul.f32.gmra.mxu0 %v545
      %v684 = vpop.f32.mrf.mxu0
      %v685 = vadd.f32 %v650, %v684
      %686 = vmatmul.f32.gmra.mxu0 %v548
      %v687 = vpop.f32.mrf.mxu0
      %v688 = vadd.f32 %v653, %v687
      %689 = vmatmul.f32.gmra.mxu0 %v551
      %v690 = vpop.f32.mrf.mxu0
      %v691 = vadd.f32 %v656, %v690
      %692 = vmatmul.f32.gmra.mxu0 %v554
      %v693 = vpop.f32.mrf.mxu0
      %v694 = vadd.f32 %v659, %v693
      %695 = vmatmul.f32.gmra.mxu0 %v557
      %v696 = vpop.f32.mrf.mxu0
      %v697 = vadd.f32 %v662, %v696
      %698 = vdwg.mxu0
      %699 = vmatpush.msra.mxu0 %v325
      %700 = vmatpush.msra.mxu0 %v321
      %701 = vmatpush.msra.mxu0 %v317
      %702 = vmatpush.msra.mxu0 %v313
      %703 = vmatpush.msra.mxu0 %v309
      %704 = vmatpush.msra.mxu0 %v305
      %705 = vmatpush.msra.mxu0 %v301
      %706 = vmatpush.msra.mxu0 %v297
      %707 = vmatpush.msra.mxu0 %v293
      %708 = vmatpush.msra.mxu0 %v289
      %709 = vmatpush.msra.mxu0 %v285
      %710 = vmatpush.msra.mxu0 %v281
      %711 = vmatpush.msra.mxu0 %v277
      %712 = vmatpush.msra.mxu0 %v273
      %713 = vmatpush.msra.mxu0 %v269
      %714 = vmatpush.msra.mxu0 %v265
      %715 = vmatmul.f32.gmra.mxu0 %v480
      %v716 = vpop.f32.mrf.mxu0
      %v717 = vadd.f32 %v513, %v716
      %718 = vmatmul.f32.gmra.mxu0 %v484
      %v719 = vpop.f32.mrf.mxu0
      %v720 = vadd.f32 %v518, %v719
      %721 = vmatmul.f32.gmra.mxu0 %v488
      %v722 = vpop.f32.mrf.mxu0
      %v723 = vadd.f32 %v523, %v722
      %724 = vmatmul.f32.gmra.mxu0 %v492
      %v725 = vpop.f32.mrf.mxu0
      %v726 = vadd.f32 %v528, %v725
      %727 = vmatmul.f32.gmra.mxu0 %v496
      %v728 = vpop.f32.mrf.mxu0
      %v729 = vadd.f32 %v533, %v728
      %730 = vmatmul.f32.gmra.mxu0 %v500
      %v731 = vpop.f32.mrf.mxu0
      %v732 = vadd.f32 %v538, %v731
      %733 = vdwg.mxu0
      %734 = vmatpush.msra.mxu0 %v389
      %735 = vmatpush.msra.mxu0 %v385
      %736 = vmatpush.msra.mxu0 %v381
      %737 = vmatpush.msra.mxu0 %v377
      %738 = vmatpush.msra.mxu0 %v373
      %739 = vmatpush.msra.mxu0 %v369
      %740 = vmatpush.msra.mxu0 %v365
      %741 = vmatpush.msra.mxu0 %v361
      %742 = vmatpush.msra.mxu0 %v357
      %743 = vmatpush.msra.mxu0 %v353
      %744 = vmatpush.msra.mxu0 %v349
      %745 = vmatpush.msra.mxu0 %v345
      %746 = vmatpush.msra.mxu0 %v341
      %747 = vmatpush.msra.mxu0 %v337
      %748 = vmatpush.msra.mxu0 %v333
      %749 = vmatpush.msra.mxu0 %v329
      %750 = vmatmul.f32.gmra.mxu0 %v481
      %v751 = vpop.f32.mrf.mxu0
      %v752 = vadd.f32 %v717, %v751
      %753 = vmatmul.f32.gmra.mxu0 %v485
      %v754 = vpop.f32.mrf.mxu0
      %v755 = vadd.f32 %v720, %v754
      %756 = vmatmul.f32.gmra.mxu0 %v489
      %v757 = vpop.f32.mrf.mxu0
      %v758 = vadd.f32 %v723, %v757
      %759 = vmatmul.f32.gmra.mxu0 %v493
      %v760 = vpop.f32.mrf.mxu0
      %v761 = vadd.f32 %v726, %v760
      %762 = vmatmul.f32.gmra.mxu0 %v497
      %v763 = vpop.f32.mrf.mxu0
      %v764 = vadd.f32 %v729, %v763
      %765 = vmatmul.f32.gmra.mxu0 %v501
      %v766 = vpop.f32.mrf.mxu0
      %v767 = vadd.f32 %v732, %v766
      %768 = vdwg.mxu0
      %769 = vmatpush.msra.mxu0 %v453
      %770 = vmatpush.msra.mxu0 %v449
      %771 = vmatpush.msra.mxu0 %v445
      %772 = vmatpush.msra.mxu0 %v441
      %773 = vmatpush.msra.mxu0 %v437
      %774 = vmatpush.msra.mxu0 %v433
      %775 = vmatpush.msra.mxu0 %v429
      %776 = vmatpush.msra.mxu0 %v425
      %777 = vmatpush.msra.mxu0 %v421
      %778 = vmatpush.msra.mxu0 %v417
      %779 = vmatpush.msra.mxu0 %v413
      %780 = vmatpush.msra.mxu0 %v409
      %781 = vmatpush.msra.mxu0 %v405
      %782 = vmatpush.msra.mxu0 %v401
      %783 = vmatpush.msra.mxu0 %v397
      %784 = vmatpush.msra.mxu0 %v393
      %785 = vmatmul.f32.gmra.mxu0 %v482
      %v786 = vpop.f32.mrf.mxu0
      %v787 = vadd.f32 %v752, %v786
      %788 = vmatmul.f32.gmra.mxu0 %v486
      %v789 = vpop.f32.mrf.mxu0
      %v790 = vadd.f32 %v755, %v789
      %791 = vmatmul.f32.gmra.mxu0 %v490
      %v792 = vpop.f32.mrf.mxu0
      %v793 = vadd.f32 %v758, %v792
      %794 = vmatmul.f32.gmra.mxu0 %v494
      %v795 = vpop.f32.mrf.mxu0
      %v796 = vadd.f32 %v761, %v795
      %797 = vmatmul.f32.gmra.mxu0 %v498
      %v798 = vpop.f32.mrf.mxu0
      %v799 = vadd.f32 %v764, %v798
      %800 = vmatmul.f32.gmra.mxu0 %v502
      %v801 = vpop.f32.mrf.mxu0
      %v802 = vadd.f32 %v767, %v801
      %803 = vdwg.mxu0
      %804 = vmatpush.msra.mxu0 0.0
      %805 = vmatpush.msra.mxu0 0.0
      %806 = vmatpush.msra.mxu0 0.0
      %807 = vmatpush.msra.mxu0 0.0
      %808 = vmatpush.msra.mxu0 0.0
      %809 = vmatpush.msra.mxu0 0.0
      %810 = vmatpush.msra.mxu0 0.0
      %811 = vmatpush.msra.mxu0 0.0
      %812 = vmatpush.msra.mxu0 0.0
      %813 = vmatpush.msra.mxu0 0.0
      %814 = vmatpush.msra.mxu0 %v477
      %815 = vmatpush.msra.mxu0 %v473
      %816 = vmatpush.msra.mxu0 %v469
      %817 = vmatpush.msra.mxu0 %v465
      %818 = vmatpush.msra.mxu0 %v461
      %819 = vmatpush.msra.mxu0 %v457
      %820 = vmatmul.f32.gmra.mxu0 %v542
      %v821 = vpop.f32.mrf.mxu0
      %v822 = vadd.f32 %v787, %v821
      %823 = vmatmul.f32.gmra.mxu0 %v545
      %v824 = vpop.f32.mrf.mxu0
      %v825 = vadd.f32 %v790, %v824
      %826 = vmatmul.f32.gmra.mxu0 %v548
      %v827 = vpop.f32.mrf.mxu0
      %v828 = vadd.f32 %v793, %v827
      %829 = vmatmul.f32.gmra.mxu0 %v551
      %v830 = vpop.f32.mrf.mxu0
      %v831 = vadd.f32 %v796, %v830
      %832 = vmatmul.f32.gmra.mxu0 %v554
      %v833 = vpop.f32.mrf.mxu0
      %v834 = vadd.f32 %v799, %v833
      %835 = vmatmul.f32.gmra.mxu0 %v557
      %v836 = vpop.f32.mrf.mxu0
      %v837 = vadd.f32 %v802, %v836
      %838 = vdwg.mxu0
      %839 = vmatpush.msra.mxu0 %v326
      %840 = vmatpush.msra.mxu0 %v322
      %841 = vmatpush.msra.mxu0 %v318
      %842 = vmatpush.msra.mxu0 %v314
      %843 = vmatpush.msra.mxu0 %v310
      %844 = vmatpush.msra.mxu0 %v306
      %845 = vmatpush.msra.mxu0 %v302
      %846 = vmatpush.msra.mxu0 %v298
      %847 = vmatpush.msra.mxu0 %v294
      %848 = vmatpush.msra.mxu0 %v290
      %849 = vmatpush.msra.mxu0 %v286
      %850 = vmatpush.msra.mxu0 %v282
      %851 = vmatpush.msra.mxu0 %v278
      %852 = vmatpush.msra.mxu0 %v274
      %853 = vmatpush.msra.mxu0 %v270
      %854 = vmatpush.msra.mxu0 %v266
      %855 = vmatmul.f32.gmra.mxu0 %v480
      %v856 = vpop.f32.mrf.mxu0
      %v857 = vadd.f32 %v513, %v856
      %858 = vmatmul.f32.gmra.mxu0 %v484
      %v859 = vpop.f32.mrf.mxu0
      %v860 = vadd.f32 %v518, %v859
      %861 = vmatmul.f32.gmra.mxu0 %v488
      %v862 = vpop.f32.mrf.mxu0
      %v863 = vadd.f32 %v523, %v862
      %864 = vmatmul.f32.gmra.mxu0 %v492
      %v865 = vpop.f32.mrf.mxu0
      %v866 = vadd.f32 %v528, %v865
      %867 = vmatmul.f32.gmra.mxu0 %v496
      %v868 = vpop.f32.mrf.mxu0
      %v869 = vadd.f32 %v533, %v868
      %870 = vmatmul.f32.gmra.mxu0 %v500
      %v871 = vpop.f32.mrf.mxu0
      %v872 = vadd.f32 %v538, %v871
      %873 = vdwg.mxu0
      %874 = vmatpush.msra.mxu0 %v390
      %875 = vmatpush.msra.mxu0 %v386
      %876 = vmatpush.msra.mxu0 %v382
      %877 = vmatpush.msra.mxu0 %v378
      %878 = vmatpush.msra.mxu0 %v374
      %879 = vmatpush.msra.mxu0 %v370
      %880 = vmatpush.msra.mxu0 %v366
      %881 = vmatpush.msra.mxu0 %v362
      %882 = vmatpush.msra.mxu0 %v358
      %883 = vmatpush.msra.mxu0 %v354
      %884 = vmatpush.msra.mxu0 %v350
      %885 = vmatpush.msra.mxu0 %v346
      %886 = vmatpush.msra.mxu0 %v342
      %887 = vmatpush.msra.mxu0 %v338
      %888 = vmatpush.msra.mxu0 %v334
      %889 = vmatpush.msra.mxu0 %v330
      %890 = vmatmul.f32.gmra.mxu0 %v481
      %v891 = vpop.f32.mrf.mxu0
      %v892 = vadd.f32 %v857, %v891
      %893 = vmatmul.f32.gmra.mxu0 %v485
      %v894 = vpop.f32.mrf.mxu0
      %v895 = vadd.f32 %v860, %v894
      %896 = vmatmul.f32.gmra.mxu0 %v489
      %v897 = vpop.f32.mrf.mxu0
      %v898 = vadd.f32 %v863, %v897
      %899 = vmatmul.f32.gmra.mxu0 %v493
      %v900 = vpop.f32.mrf.mxu0
      %v901 = vadd.f32 %v866, %v900
      %902 = vmatmul.f32.gmra.mxu0 %v497
      %v903 = vpop.f32.mrf.mxu0
      %v904 = vadd.f32 %v869, %v903
      %905 = vmatmul.f32.gmra.mxu0 %v501
      %v906 = vpop.f32.mrf.mxu0
      %v907 = vadd.f32 %v872, %v906
      %908 = vdwg.mxu0
      %909 = vmatpush.msra.mxu0 %v454
      %910 = vmatpush.msra.mxu0 %v450
      %911 = vmatpush.msra.mxu0 %v446
      %912 = vmatpush.msra.mxu0 %v442
      %913 = vmatpush.msra.mxu0 %v438
      %914 = vmatpush.msra.mxu0 %v434
      %915 = vmatpush.msra.mxu0 %v430
      %916 = vmatpush.msra.mxu0 %v426
      %917 = vmatpush.msra.mxu0 %v422
      %918 = vmatpush.msra.mxu0 %v418
      %919 = vmatpush.msra.mxu0 %v414
      %920 = vmatpush.msra.mxu0 %v410
      %921 = vmatpush.msra.mxu0 %v406
      %922 = vmatpush.msra.mxu0 %v402
      %923 = vmatpush.msra.mxu0 %v398
      %924 = vmatpush.msra.mxu0 %v394
      %925 = vmatmul.f32.gmra.mxu0 %v482
      %v926 = vpop.f32.mrf.mxu0
      %v927 = vadd.f32 %v892, %v926
      %928 = vmatmul.f32.gmra.mxu0 %v486
      %v929 = vpop.f32.mrf.mxu0
      %v930 = vadd.f32 %v895, %v929
      %931 = vmatmul.f32.gmra.mxu0 %v490
      %v932 = vpop.f32.mrf.mxu0
      %v933 = vadd.f32 %v898, %v932
      %934 = vmatmul.f32.gmra.mxu0 %v494
      %v935 = vpop.f32.mrf.mxu0
      %v936 = vadd.f32 %v901, %v935
      %937 = vmatmul.f32.gmra.mxu0 %v498
      %v938 = vpop.f32.mrf.mxu0
      %v939 = vadd.f32 %v904, %v938
      %940 = vmatmul.f32.gmra.mxu0 %v502
      %v941 = vpop.f32.mrf.mxu0
      %v942 = vadd.f32 %v907, %v941
      %943 = vdwg.mxu0
      %944 = vmatpush.msra.mxu0 0.0
      %945 = vmatpush.msra.mxu0 0.0
      %946 = vmatpush.msra.mxu0 0.0
      %947 = vmatpush.msra.mxu0 0.0
      %948 = vmatpush.msra.mxu0 0.0
      %949 = vmatpush.msra.mxu0 0.0
      %950 = vmatpush.msra.mxu0 0.0
      %951 = vmatpush.msra.mxu0 0.0
      %952 = vmatpush.msra.mxu0 0.0
      %953 = vmatpush.msra.mxu0 0.0
      %954 = vmatpush.msra.mxu0 %v478
      %955 = vmatpush.msra.mxu0 %v474
      %956 = vmatpush.msra.mxu0 %v470
      %957 = vmatpush.msra.mxu0 %v466
      %958 = vmatpush.msra.mxu0 %v462
      %959 = vmatpush.msra.mxu0 %v458
      %960 = vmatmul.f32.gmra.mxu0 %v542
      %v961 = vpop.f32.mrf.mxu0
      %v962 = vadd.f32 %v927, %v961
      %963 = vmatmul.f32.gmra.mxu0 %v545
      %v964 = vpop.f32.mrf.mxu0
      %v965 = vadd.f32 %v930, %v964
      %966 = vmatmul.f32.gmra.mxu0 %v548
      %v967 = vpop.f32.mrf.mxu0
      %v968 = vadd.f32 %v933, %v967
      %969 = vmatmul.f32.gmra.mxu0 %v551
      %v970 = vpop.f32.mrf.mxu0
      %v971 = vadd.f32 %v936, %v970
      %972 = vmatmul.f32.gmra.mxu0 %v554
      %v973 = vpop.f32.mrf.mxu0
      %v974 = vadd.f32 %v939, %v973
      %975 = vmatmul.f32.gmra.mxu0 %v557
      %v976 = vpop.f32.mrf.mxu0
      %v977 = vadd.f32 %v942, %v976
      %978 = vdwg.mxu0
      %979 = vmatpush.msra.mxu0 %v327
      %980 = vmatpush.msra.mxu0 %v323
      %981 = vmatpush.msra.mxu0 %v319
      %982 = vmatpush.msra.mxu0 %v315
      %983 = vmatpush.msra.mxu0 %v311
      %984 = vmatpush.msra.mxu0 %v307
      %985 = vmatpush.msra.mxu0 %v303
      %986 = vmatpush.msra.mxu0 %v299
      %987 = vmatpush.msra.mxu0 %v295
      %988 = vmatpush.msra.mxu0 %v291
      %989 = vmatpush.msra.mxu0 %v287
      %990 = vmatpush.msra.mxu0 %v283
      %991 = vmatpush.msra.mxu0 %v279
      %992 = vmatpush.msra.mxu0 %v275
      %993 = vmatpush.msra.mxu0 %v271
      %994 = vmatpush.msra.mxu0 %v267
      %995 = vmatmul.f32.gmra.mxu0 %v480
      %v996 = vpop.f32.mrf.mxu0
      %v997 = vadd.f32 %v513, %v996
      %998 = vmatmul.f32.gmra.mxu0 %v484
      %v999 = vpop.f32.mrf.mxu0
      %v1000 = vadd.f32 %v518, %v999
      %1001 = vmatmul.f32.gmra.mxu0 %v488
      %v1002 = vpop.f32.mrf.mxu0
      %v1003 = vadd.f32 %v523, %v1002
      %1004 = vmatmul.f32.gmra.mxu0 %v492
      %v1005 = vpop.f32.mrf.mxu0
      %v1006 = vadd.f32 %v528, %v1005
      %1007 = vmatmul.f32.gmra.mxu0 %v496
      %v1008 = vpop.f32.mrf.mxu0
      %v1009 = vadd.f32 %v533, %v1008
      %1010 = vmatmul.f32.gmra.mxu0 %v500
      %v1011 = vpop.f32.mrf.mxu0
      %v1012 = vadd.f32 %v538, %v1011
      %1013 = vdwg.mxu0
      %1014 = vmatpush.msra.mxu0 %v391
      %1015 = vmatpush.msra.mxu0 %v387
      %1016 = vmatpush.msra.mxu0 %v383
      %1017 = vmatpush.msra.mxu0 %v379
      %1018 = vmatpush.msra.mxu0 %v375
      %1019 = vmatpush.msra.mxu0 %v371
      %1020 = vmatpush.msra.mxu0 %v367
      %1021 = vmatpush.msra.mxu0 %v363
      %1022 = vmatpush.msra.mxu0 %v359
      %1023 = vmatpush.msra.mxu0 %v355
      %1024 = vmatpush.msra.mxu0 %v351
      %1025 = vmatpush.msra.mxu0 %v347
      %1026 = vmatpush.msra.mxu0 %v343
      %1027 = vmatpush.msra.mxu0 %v339
      %1028 = vmatpush.msra.mxu0 %v335
      %1029 = vmatpush.msra.mxu0 %v331
      %1030 = vmatmul.f32.gmra.mxu0 %v481
      %v1031 = vpop.f32.mrf.mxu0
      %v1032 = vadd.f32 %v997, %v1031
      %1033 = vmatmul.f32.gmra.mxu0 %v485
      %v1034 = vpop.f32.mrf.mxu0
      %v1035 = vadd.f32 %v1000, %v1034
      %1036 = vmatmul.f32.gmra.mxu0 %v489
      %v1037 = vpop.f32.mrf.mxu0
      %v1038 = vadd.f32 %v1003, %v1037
      %1039 = vmatmul.f32.gmra.mxu0 %v493
      %v1040 = vpop.f32.mrf.mxu0
      %v1041 = vadd.f32 %v1006, %v1040
      %1042 = vmatmul.f32.gmra.mxu0 %v497
      %v1043 = vpop.f32.mrf.mxu0
      %v1044 = vadd.f32 %v1009, %v1043
      %1045 = vmatmul.f32.gmra.mxu0 %v501
      %v1046 = vpop.f32.mrf.mxu0
      %v1047 = vadd.f32 %v1012, %v1046
      %1048 = vdwg.mxu0
      %1049 = vmatpush.msra.mxu0 %v455
      %1050 = vmatpush.msra.mxu0 %v451
      %1051 = vmatpush.msra.mxu0 %v447
      %1052 = vmatpush.msra.mxu0 %v443
      %1053 = vmatpush.msra.mxu0 %v439
      %1054 = vmatpush.msra.mxu0 %v435
      %1055 = vmatpush.msra.mxu0 %v431
      %1056 = vmatpush.msra.mxu0 %v427
      %1057 = vmatpush.msra.mxu0 %v423
      %1058 = vmatpush.msra.mxu0 %v419
      %1059 = vmatpush.msra.mxu0 %v415
      %1060 = vmatpush.msra.mxu0 %v411
      %1061 = vmatpush.msra.mxu0 %v407
      %1062 = vmatpush.msra.mxu0 %v403
      %1063 = vmatpush.msra.mxu0 %v399
      %1064 = vmatpush.msra.mxu0 %v395
      %1065 = vmatmul.f32.gmra.mxu0 %v482
      %v1066 = vpop.f32.mrf.mxu0
      %v1067 = vadd.f32 %v1032, %v1066
      %1068 = vmatmul.f32.gmra.mxu0 %v486
      %v1069 = vpop.f32.mrf.mxu0
      %v1070 = vadd.f32 %v1035, %v1069
      %1071 = vmatmul.f32.gmra.mxu0 %v490
      %v1072 = vpop.f32.mrf.mxu0
      %v1073 = vadd.f32 %v1038, %v1072
      %1074 = vmatmul.f32.gmra.mxu0 %v494
      %v1075 = vpop.f32.mrf.mxu0
      %v1076 = vadd.f32 %v1041, %v1075
      %1077 = vmatmul.f32.gmra.mxu0 %v498
      %v1078 = vpop.f32.mrf.mxu0
      %v1079 = vadd.f32 %v1044, %v1078
      %1080 = vmatmul.f32.gmra.mxu0 %v502
      %v1081 = vpop.f32.mrf.mxu0
      %v1082 = vadd.f32 %v1047, %v1081
      %1083 = vdwg.mxu0
      %1084 = vmatpush.msra.mxu0 0.0
      %1085 = vmatpush.msra.mxu0 0.0
      %1086 = vmatpush.msra.mxu0 0.0
      %1087 = vmatpush.msra.mxu0 0.0
      %1088 = vmatpush.msra.mxu0 0.0
      %1089 = vmatpush.msra.mxu0 0.0
      %1090 = vmatpush.msra.mxu0 0.0
      %1091 = vmatpush.msra.mxu0 0.0
      %1092 = vmatpush.msra.mxu0 0.0
      %1093 = vmatpush.msra.mxu0 0.0
      %1094 = vmatpush.msra.mxu0 %v479
      %1095 = vmatpush.msra.mxu0 %v475
      %1096 = vmatpush.msra.mxu0 %v471
      %1097 = vmatpush.msra.mxu0 %v467
      %1098 = vmatpush.msra.mxu0 %v463
      %1099 = vmatpush.msra.mxu0 %v459
      %1100 = vmatmul.f32.gmra.mxu0 %v542
      %v1101 = vpop.f32.mrf.mxu0
      %v1102 = vadd.f32 %v1067, %v1101
      %1103 = vmatmul.f32.gmra.mxu0 %v545
      %v1104 = vpop.f32.mrf.mxu0
      %v1105 = vadd.f32 %v1070, %v1104
      %1106 = vmatmul.f32.gmra.mxu0 %v548
      %v1107 = vpop.f32.mrf.mxu0
      %v1108 = vadd.f32 %v1073, %v1107
      %1109 = vmatmul.f32.gmra.mxu0 %v551
      %v1110 = vpop.f32.mrf.mxu0
      %v1111 = vadd.f32 %v1076, %v1110
      %1112 = vmatmul.f32.gmra.mxu0 %v554
      %v1113 = vpop.f32.mrf.mxu0
      %v1114 = vadd.f32 %v1079, %v1113
      %1115 = vmatmul.f32.gmra.mxu0 %v557
      %v1116 = vpop.f32.mrf.mxu0
      %v1117 = vadd.f32 %v1082, %v1116
      %1118 = vdwg.mxu0
      %v1119 = vmax.f32 %v682, 0.0
      %v1120 = vmax.f32 %v822, 0.0
      %v1121 = vmax.f32 %v962, 0.0
      %v1122 = vmax.f32 %v1102, 0.0
      %v1123 = vmax.f32 %v685, 0.0
      %v1124 = vmax.f32 %v825, 0.0
      %v1125 = vmax.f32 %v965, 0.0
      %v1126 = vmax.f32 %v1105, 0.0
      %v1127 = vmax.f32 %v688, 0.0
      %v1128 = vmax.f32 %v828, 0.0
      %v1129 = vmax.f32 %v968, 0.0
      %v1130 = vmax.f32 %v1108, 0.0
      %v1131 = vmax.f32 %v691, 0.0
      %v1132 = vmax.f32 %v831, 0.0
      %v1133 = vmax.f32 %v971, 0.0
      %v1134 = vmax.f32 %v1111, 0.0
      %v1135 = vmax.f32 %v694, 0.0
      %v1136 = vmax.f32 %v834, 0.0
      %v1137 = vmax.f32 %v974, 0.0
      %v1138 = vmax.f32 %v1114, 0.0
      %v1139 = vmax.f32 %v697, 0.0
      %v1140 = vmax.f32 %v837, 0.0
      %v1141 = vmax.f32 %v977, 0.0
      %v1142 = vmax.f32 %v1117, 0.0
      %v1143 = vld [vmem:[%s3] sm:$0xff]
      %v1144 = vld [vmem:[%s3 + $0x8] sm:$0x3]
      %v1145 = vld [vmem:[%s4] sm:$0xff]
      %v1146 = vld [vmem:[%s4 + $0x8] sm:$0x3]
      %1148 = vset.pattern.permute.xlu0 0
      %1149 = vperm.xlu0 %1148, %v1145
      %v1150 = vpop.permute.xlu0 %1149
      %1153 = vset.pattern.permute.xlu0 0
      %1154 = vperm.xlu0 %1153, %v1146
      %v1155 = vpop.permute.xlu0 %1154
      %v1158 = vsel %vm540, %v1143, 0
      %v1161 = vsel %vm540, %v1144, 0
      %1163 = vmatpush.msra.mxu0 0.0
      %1164 = vmatpush.msra.mxu0 0.0
      %1165 = vmatpush.msra.mxu0 0.0
      %1166 = vmatpush.msra.mxu0 0.0
      %1167 = vmatpush.msra.mxu0 0.0
      %1168 = vmatpush.msra.mxu0 0.0
      %1169 = vmatpush.msra.mxu0 0.0
      %1170 = vmatpush.msra.mxu0 0.0
      %1171 = vmatpush.msra.mxu0 0.0
      %1172 = vmatpush.msra.mxu0 0.0
      %1173 = vmatpush.msra.mxu0 %v1139
      %1174 = vmatpush.msra.mxu0 %v1135
      %1175 = vmatpush.msra.mxu0 %v1131
      %1176 = vmatpush.msra.mxu0 %v1127
      %1177 = vmatpush.msra.mxu0 %v1123
      %1178 = vmatpush.msra.mxu0 %v1119
      %1179 = vmatmul.f32.gmra.mxu0 %v1158
      %v1180 = vpop.f32.mrf.mxu0
      %v1181 = vadd.f32 %v1150, %v1180
      %1182 = vmatmul.f32.gmra.mxu0 %v1161
      %v1183 = vpop.f32.mrf.mxu0
      %v1184 = vadd.f32 %v1155, %v1183
      %1185 = vdwg.mxu0
      %1186 = vmatpush.msra.mxu0 0.0
      %1187 = vmatpush.msra.mxu0 0.0
      %1188 = vmatpush.msra.mxu0 0.0
      %1189 = vmatpush.msra.mxu0 0.0
      %1190 = vmatpush.msra.mxu0 0.0
      %1191 = vmatpush.msra.mxu0 0.0
      %1192 = vmatpush.msra.mxu0 0.0
      %1193 = vmatpush.msra.mxu0 0.0
      %1194 = vmatpush.msra.mxu0 0.0
      %1195 = vmatpush.msra.mxu0 0.0
      %1196 = vmatpush.msra.mxu0 %v1140
      %1197 = vmatpush.msra.mxu0 %v1136
      %1198 = vmatpush.msra.mxu0 %v1132
      %1199 = vmatpush.msra.mxu0 %v1128
      %1200 = vmatpush.msra.mxu0 %v1124
      %1201 = vmatpush.msra.mxu0 %v1120
      %1202 = vmatmul.f32.gmra.mxu0 %v1158
      %v1203 = vpop.f32.mrf.mxu0
      %v1204 = vadd.f32 %v1150, %v1203
      %1205 = vmatmul.f32.gmra.mxu0 %v1161
      %v1206 = vpop.f32.mrf.mxu0
      %v1207 = vadd.f32 %v1155, %v1206
      %1208 = vdwg.mxu0
      %1209 = vmatpush.msra.mxu0 0.0
      %1210 = vmatpush.msra.mxu0 0.0
      %1211 = vmatpush.msra.mxu0 0.0
      %1212 = vmatpush.msra.mxu0 0.0
      %1213 = vmatpush.msra.mxu0 0.0
      %1214 = vmatpush.msra.mxu0 0.0
      %1215 = vmatpush.msra.mxu0 0.0
      %1216 = vmatpush.msra.mxu0 0.0
      %1217 = vmatpush.msra.mxu0 0.0
      %1218 = vmatpush.msra.mxu0 0.0
      %1219 = vmatpush.msra.mxu0 %v1141
      %1220 = vmatpush.msra.mxu0 %v1137
      %1221 = vmatpush.msra.mxu0 %v1133
      %1222 = vmatpush.msra.mxu0 %v1129
      %1223 = vmatpush.msra.mxu0 %v1125
      %1224 = vmatpush.msra.mxu0 %v1121
      %1225 = vmatmul.f32.gmra.mxu0 %v1158
      %v1226 = vpop.f32.mrf.mxu0
      %v1227 = vadd.f32 %v1150, %v1226
      %1228 = vmatmul.f32.gmra.mxu0 %v1161
      %v1229 = vpop.f32.mrf.mxu0
      %v1230 = vadd.f32 %v1155, %v1229
      %1231 = vdwg.mxu0
      %1232 = vmatpush.msra.mxu0 0.0
      %1233 = vmatpush.msra.mxu0 0.0
      %1234 = vmatpush.msra.mxu0 0.0
      %1235 = vmatpush.msra.mxu0 0.0
      %1236 = vmatpush.msra.mxu0 0.0
      %1237 = vmatpush.msra.mxu0 0.0
      %1238 = vmatpush.msra.mxu0 0.0
      %1239 = vmatpush.msra.mxu0 0.0
      %1240 = vmatpush.msra.mxu0 0.0
      %1241 = vmatpush.msra.mxu0 0.0
      %1242 = vmatpush.msra.mxu0 %v1142
      %1243 = vmatpush.msra.mxu0 %v1138
      %1244 = vmatpush.msra.mxu0 %v1134
      %1245 = vmatpush.msra.mxu0 %v1130
      %1246 = vmatpush.msra.mxu0 %v1126
      %1247 = vmatpush.msra.mxu0 %v1122
      %1248 = vmatmul.f32.gmra.mxu0 %v1158
      %v1249 = vpop.f32.mrf.mxu0
      %v1250 = vadd.f32 %v1150, %v1249
      %1251 = vmatmul.f32.gmra.mxu0 %v1161
      %v1252 = vpop.f32.mrf.mxu0
      %v1253 = vadd.f32 %v1155, %v1252
      %1254 = vdwg.mxu0
      %v1255 = vlaneseq
      %v1256 = vshrl.u32 %v1255, 7
      %v1257 = vadd.s32 %v1256, 8
      %vm1258 = vcmp.lt.s32.totalorder %v1256, 4
      %vm1259 = vcmp.lt.s32.totalorder %v1257, 4
      %v1260 = vxor.u32 %v1181, 2147483648
      %v1261 = vxor.u32 %v1204, 2147483648
      %v1262 = vxor.u32 %v1227, 2147483648
      %v1263 = vxor.u32 %v1250, 2147483648
      %v1264 = vxor.u32 %v1184, 2147483648
      %v1265 = vxor.u32 %v1207, 2147483648
      %v1266 = vxor.u32 %v1230, 2147483648
      %v1267 = vxor.u32 %v1253, 2147483648
      %v1268 = vmul.f32 %v1260, 1.442695
      %v1269 = vpow.pop %v1268
      %v1270 = vmul.f32 %v1261, 1.442695
      %v1271 = vpow.pop %v1270
      %v1272 = vmul.f32 %v1262, 1.442695
      %v1273 = vpow.pop %v1272
      %v1274 = vmul.f32 %v1263, 1.442695
      %v1275 = vpow.pop %v1274
      %v1276 = vmul.f32 %v1264, 1.442695
      %v1277 = vpow.pop %v1276
      %v1278 = vmul.f32 %v1265, 1.442695
      %v1279 = vpow.pop %v1278
      %v1280 = vmul.f32 %v1266, 1.442695
      %v1281 = vpow.pop %v1280
      %v1282 = vmul.f32 %v1267, 1.442695
      %v1283 = vpow.pop %v1282
      %v1284 = vadd.f32 %v1269, 1.0
      %v1285 = vadd.f32 %v1271, 1.0
      %v1286 = vadd.f32 %v1273, 1.0
      %v1287 = vadd.f32 %v1275, 1.0
      %v1288 = vadd.f32 %v1277, 1.0
      %v1289 = vadd.f32 %v1279, 1.0
      %v1290 = vadd.f32 %v1281, 1.0
      %v1291 = vadd.f32 %v1283, 1.0
      %v1292 = vrcp.pop %v1284
      %v1293 = vmul.f32 %v1284, %v1292
      %v1294 = vsub.f32 1.0, %v1293
      %v1295 = vmul.f32 %v1292, %v1294
      %v1296 = vadd.f32 %v1292, %v1295
      %vm1297 = vweird.f32 %v1284
      %vm1298 = vweird.f32 %v1292
      %vm1299 = vmor %vm1297, %vm1298
      %v1300 = vsel %vm1299, %v1292, %v1296
      %v1301 = vand.u32 2147483647, %v1284
      %vm1302 = vcmp.eq.f32.partialorder %v1301, 8.507059e+37
      %v1303 = vand.u32 %v1284, 2147483648
      %v1304 = vor.u32 1.1754944e-38, %v1303
      %v1305 = vsel %vm1302, %v1304, %v1300
      %v1306 = vmul.f32 1.0, %v1305
      %v1307 = vrcp.pop %v1285
      %v1308 = vmul.f32 %v1285, %v1307
      %v1309 = vsub.f32 1.0, %v1308
      %v1310 = vmul.f32 %v1307, %v1309
      %v1311 = vadd.f32 %v1307, %v1310
      %vm1312 = vweird.f32 %v1285
      %vm1313 = vweird.f32 %v1307
      %vm1314 = vmor %vm1312, %vm1313
      %v1315 = vsel %vm1314, %v1307, %v1311
      %v1316 = vand.u32 2147483647, %v1285
      %vm1317 = vcmp.eq.f32.partialorder %v1316, 8.507059e+37
      %v1318 = vand.u32 %v1285, 2147483648
      %v1319 = vor.u32 1.1754944e-38, %v1318
      %v1320 = vsel %vm1317, %v1319, %v1315
      %v1321 = vmul.f32 1.0, %v1320
      %v1322 = vrcp.pop %v1286
      %v1323 = vmul.f32 %v1286, %v1322
      %v1324 = vsub.f32 1.0, %v1323
      %v1325 = vmul.f32 %v1322, %v1324
      %v1326 = vadd.f32 %v1322, %v1325
      %vm1327 = vweird.f32 %v1286
      %vm1328 = vweird.f32 %v1322
      %vm1329 = vmor %vm1327, %vm1328
      %v1330 = vsel %vm1329, %v1322, %v1326
      %v1331 = vand.u32 2147483647, %v1286
      %vm1332 = vcmp.eq.f32.partialorder %v1331, 8.507059e+37
      %v1333 = vand.u32 %v1286, 2147483648
      %v1334 = vor.u32 1.1754944e-38, %v1333
      %v1335 = vsel %vm1332, %v1334, %v1330
      %v1336 = vmul.f32 1.0, %v1335
      %v1337 = vrcp.pop %v1287
      %v1338 = vmul.f32 %v1287, %v1337
      %v1339 = vsub.f32 1.0, %v1338
      %v1340 = vmul.f32 %v1337, %v1339
      %v1341 = vadd.f32 %v1337, %v1340
      %vm1342 = vweird.f32 %v1287
      %vm1343 = vweird.f32 %v1337
      %vm1344 = vmor %vm1342, %vm1343
      %v1345 = vsel %vm1344, %v1337, %v1341
      %v1346 = vand.u32 2147483647, %v1287
      %vm1347 = vcmp.eq.f32.partialorder %v1346, 8.507059e+37
      %v1348 = vand.u32 %v1287, 2147483648
      %v1349 = vor.u32 1.1754944e-38, %v1348
      %v1350 = vsel %vm1347, %v1349, %v1345
      %v1351 = vmul.f32 1.0, %v1350
      %v1352 = vrcp.pop %v1288
      %v1353 = vmul.f32 %v1288, %v1352
      %v1354 = vsub.f32 1.0, %v1353
      %v1355 = vmul.f32 %v1352, %v1354
      %v1356 = vadd.f32 %v1352, %v1355
      %vm1357 = vweird.f32 %v1288
      %vm1358 = vweird.f32 %v1352
      %vm1359 = vmor %vm1357, %vm1358
      %v1360 = vsel %vm1359, %v1352, %v1356
      %v1361 = vand.u32 2147483647, %v1288
      %vm1362 = vcmp.eq.f32.partialorder %v1361, 8.507059e+37
      %v1363 = vand.u32 %v1288, 2147483648
      %v1364 = vor.u32 1.1754944e-38, %v1363
      %v1365 = vsel %vm1362, %v1364, %v1360
      %v1366 = vmul.f32 1.0, %v1365
      %v1367 = vrcp.pop %v1289
      %v1368 = vmul.f32 %v1289, %v1367
      %v1369 = vsub.f32 1.0, %v1368
      %v1370 = vmul.f32 %v1367, %v1369
      %v1371 = vadd.f32 %v1367, %v1370
      %vm1372 = vweird.f32 %v1289
      %vm1373 = vweird.f32 %v1367
      %vm1374 = vmor %vm1372, %vm1373
      %v1375 = vsel %vm1374, %v1367, %v1371
      %v1376 = vand.u32 2147483647, %v1289
      %vm1377 = vcmp.eq.f32.partialorder %v1376, 8.507059e+37
      %v1378 = vand.u32 %v1289, 2147483648
      %v1379 = vor.u32 1.1754944e-38, %v1378
      %v1380 = vsel %vm1377, %v1379, %v1375
      %v1381 = vmul.f32 1.0, %v1380
      %v1382 = vrcp.pop %v1290
      %v1383 = vmul.f32 %v1290, %v1382
      %v1384 = vsub.f32 1.0, %v1383
      %v1385 = vmul.f32 %v1382, %v1384
      %v1386 = vadd.f32 %v1382, %v1385
      %vm1387 = vweird.f32 %v1290
      %vm1388 = vweird.f32 %v1382
      %vm1389 = vmor %vm1387, %vm1388
      %v1390 = vsel %vm1389, %v1382, %v1386
      %v1391 = vand.u32 2147483647, %v1290
      %vm1392 = vcmp.eq.f32.partialorder %v1391, 8.507059e+37
      %v1393 = vand.u32 %v1290, 2147483648
      %v1394 = vor.u32 1.1754944e-38, %v1393
      %v1395 = vsel %vm1392, %v1394, %v1390
      %v1396 = vmul.f32 1.0, %v1395
      %v1397 = vrcp.pop %v1291
      %v1398 = vmul.f32 %v1291, %v1397
      %v1399 = vsub.f32 1.0, %v1398
      %v1400 = vmul.f32 %v1397, %v1399
      %v1401 = vadd.f32 %v1397, %v1400
      %vm1402 = vweird.f32 %v1291
      %vm1403 = vweird.f32 %v1397
      %vm1404 = vmor %vm1402, %vm1403
      %v1405 = vsel %vm1404, %v1397, %v1401
      %v1406 = vand.u32 2147483647, %v1291
      %vm1407 = vcmp.eq.f32.partialorder %v1406, 8.507059e+37
      %v1408 = vand.u32 %v1291, 2147483648
      %v1409 = vor.u32 1.1754944e-38, %v1408
      %v1410 = vsel %vm1407, %v1409, %v1405
      %v1411 = vmul.f32 1.0, %v1410
      %v1412 = vsel %vm1258, %v1306, %v1181
      %v1413 = vsel %vm1258, %v1321, %v1204
      %v1414 = vsel %vm1258, %v1336, %v1227
      %v1415 = vsel %vm1258, %v1351, %v1250
      %v1416 = vsel %vm1259, %v1366, %v1184
      %v1417 = vsel %vm1259, %v1381, %v1207
      %v1418 = vsel %vm1259, %v1396, %v1230
      %v1419 = vsel %vm1259, %v1411, %v1253
      %1420 = vst [vmem:[%s262] sm:$0xff] %v1412
      %1421 = vst [vmem:[%s262 + $0x8] sm:$0xff] %v1413
      %1422 = vst [vmem:[%s262 + $0x10] sm:$0xff] %v1414
      %1423 = vst [vmem:[%s262 + $0x18] sm:$0xff] %v1415
      %1424 = vst [vmem:[%s262 + $0x20] sm:$0x3] %v1416
      %1425 = vst [vmem:[%s262 + $0x28] sm:$0x3] %v1417
      %1426 = vst [vmem:[%s262 + $0x30] sm:$0x3] %v1418
      %1427 = vst [vmem:[%s262 + $0x38] sm:$0x3] %v1419
      %s1428 = smul.u32 4, %s21
      %p1429 = scmp.lt.s32.totalorder %s20, 1
      %s1430 = scalar_select %p1429, %s20, 1
      %p1431 = scmp.lt.s32.totalorder %s1428, 3
      %s1432 = scalar_select %p1431, %s1428, 3
      %s1433 = smul.addr %s1430, 8
      %s1434 = sadd.s32 %s1432, %s1433
      %s1435 = smul.addr %s1434, 8
      %s1436 = scalar_lea.vmem %s5, %s1435
      // Predicated region
      $region41: #{head_forward.1} parent=39 // pred_check
        %p1437 = pneg %p160
      $region42: #{head_forward.1} parent=39 // pred_check_branch
        %1439 = sbr.rel (%p1437) target = $region44
      $region43: #{head_forward.1} parent=39 // pred_region
        %s1440 = smul.u32 4, %s21
      $region44: #{head_forward.1} parent=39 // pred_fallthru
        _
    $region40: #{head_forward.1} parent=5 // pred_fallthru
      _
    %p1441 = scmp.le.s32.totalorder 2, %s11
    // Predicated region
    $region45: #{head_forward.1} parent=5 // pred_check
      %p1442 = pneg %p1441
    $region46: #{head_forward.1} parent=5 // pred_check_branch
      %1444 = sbr.rel (%p1442) target = $region48
    $region47: #{head_forward.1} parent=5 // pred_region
      %s1445 = ssub.s32 %s11, 2
      // Predicated region
      $region49: #{head_forward.1} parent=47 // pred_check
        %p1446 = pneg %p166
      $region50: #{head_forward.1} parent=47 // pred_check_branch
        %1448 = sbr.rel (%p1446) target = $region52
      $region51: #{head_forward.1} parent=47 // pred_region
        %s1449 = smul.u32 4, %s23
        %p1450 = scmp.lt.s32.totalorder %s22, 1
        %s1451 = scalar_select %p1450, %s22, 1
        %p1452 = scmp.lt.s32.totalorder %s1449, 3
        %s1453 = scalar_select %p1452, %s1449, 3
        %s1454 = smul.addr %s1451, 8
        %s1455 = sadd.s32 %s1453, %s1454
        %s1456 = smul.addr %s1455, 8
        %s1457 = scalar_lea.vmem %s5, %s1456
      $region52: #{head_forward.1} parent=47 // pred_fallthru
        _
    $region48: #{head_forward.1} parent=5 // pred_fallthru
      _
  $region6: #{head_forward.1} parent=0 // loop_footer
    %s15 = sadd.s32 1, %s11
  $region7: #{head_forward.1} parent=0 // loop_footer_branch
    %10 = sbr.rel target = $region3
  $region8: #{head_forward.1} parent=0 // loop_exit
    _

</llo_original>
